<compile_context>
chip_gen: v6e
topology: v6e:2x2x1
jax: 0.10.0
libtpu: 0.0.40
codegen_flags: <defaults>
</compile_context>

<pallas_src>
from functools import partial

import jax
import jax.numpy as jnp
from jax.experimental import pallas as pl
from jax.experimental.pallas import tpu as pltpu


def _mha_self_attention_kernel(x_ref, wqkv_ref, bqkv_ref, wo_ref, bo_ref,
                               o_ref, *, num_heads):
    """One block of `batch_block` batches per grid step.

    x_ref:    (BB, S, E)  bfloat16
    wqkv_ref: (E, 3E)     bfloat16   fused [Wq | Wk | Wv]
    bqkv_ref: (1, 3E)     float32
    wo_ref:   (E, E)      bfloat16
    bo_ref:   (1, E)      float32
    o_ref:    (BB, S, E)  float32
    """
    xb = x_ref[...]                       # (BB, S, E) bf16
    BB, S, E = xb.shape
    H = num_heads
    D = E // H
    R = BB * S
    scale = 1.0 / (D ** 0.5)

    x2d = xb.reshape(R, E)                # collapse (BB, S) -> rows; layout no-op

    # Fused QKV projection: one wide bf16 MXU matmul, f32 accumulation.
    qkv = jnp.dot(x2d, wqkv_ref[...], preferred_element_type=jnp.float32)
    qkv = qkv + bqkv_ref[...]             # (R, 3E) f32, bias broadcast over rows

    q = qkv[:, :E]
    k = qkv[:, E:2 * E]
    v = qkv[:, 2 * E:]

    def to_heads(t):                      # (R, E) f32 -> (BB*H, S, D)
        return t.reshape(BB, S, H, D).transpose(0, 2, 1, 3).reshape(BB * H, S, D)

    qh = to_heads(q).astype(jnp.bfloat16)
    kh = to_heads(k).astype(jnp.bfloat16)
    vh = to_heads(v).astype(jnp.bfloat16)

    # Head-batched scaled dot-product attention (no per-head Python loop).
    scores = jnp.einsum("bqd,bkd->bqk", qh, kh,
                        preferred_element_type=jnp.float32) * scale  # (BB*H, S, S) f32

    # Softmax in f32; EUP reciprocal instead of a per-element VALU divide.
    m = jnp.max(scores, axis=-1, keepdims=True)
    p = jnp.exp(scores - m)
    denom = jnp.sum(p, axis=-1, keepdims=True)
    attn = p * pl.reciprocal(denom, approx=True)

    ctx = jnp.einsum("bqk,bkd->bqd", attn.astype(jnp.bfloat16), vh,
                     preferred_element_type=jnp.float32)             # (BB*H, S, D) f32

    ctx2d = ctx.reshape(BB, H, S, D).transpose(0, 2, 1, 3).reshape(R, E)

    # Output projection (bf16 operands, f32 accumulation) + bias.
    out = jnp.dot(ctx2d.astype(jnp.bfloat16), wo_ref[...],
                  preferred_element_type=jnp.float32) + bo_ref[...]
    o_ref[...] = out.reshape(BB, S, E)


def _pick_batch_block(B, S, target_rows=256):
    """Largest divisor of B giving ~target_rows projection rows per grid step."""
    bb = max(1, min(B, -(-target_rows // max(S, 1))))
    while B % bb:
        bb -= 1
    return bb


def dynamic_hierarchical_self_attention(x, params, *, num_heads, batch_block=None):
    """Pallas wrapper.

    x: (B, S, E) float32.
    params: dict with pre-transposed, QKV-fused weights:
      wqkv (E, 3E), bqkv (1, 3E), wo (E, E), bo (1, E), all float32.
    """
    B, S, E = x.shape
    assert E % num_heads == 0

    if batch_block is None:
        batch_block = _pick_batch_block(B, S)
    assert B % batch_block == 0
    grid = (B // batch_block,)

    # bf16 operands for the MXU; biases stay f32 (added to the f32 accumulator).
    x_bf = x.astype(jnp.bfloat16)
    wqkv = params["wqkv"].astype(jnp.bfloat16)
    wo = params["wo"].astype(jnp.bfloat16)
    bqkv = params["bqkv"].astype(jnp.float32)
    bo = params["bo"].astype(jnp.float32)

    # Weights/biases: resident in VMEM once (constant across the grid),
    # no per-step DMA and no double-buffered copies.
    resident = pl.BlockSpec(memory_space=pltpu.MemorySpace.VMEM)

    kernel = partial(_mha_self_attention_kernel, num_heads=num_heads)

    return pl.pallas_call(
        kernel,
        out_shape=jax.ShapeDtypeStruct((B, S, E), jnp.float32),
        grid=grid,
        in_specs=[
            pl.BlockSpec((batch_block, S, E), lambda i: (i, 0, 0)),  # x
            resident,   # wqkv
            resident,   # bqkv
            resident,   # wo
            resident,   # bo
        ],
        out_specs=pl.BlockSpec((batch_block, S, E), lambda i: (i, 0, 0)),
        compiler_params=pltpu.CompilerParams(
            dimension_semantics=("parallel",)),
    )(x_bf, wqkv, bqkv, wo, bo)


def _reference_mha(x, params, num_heads):
    """Pure-JAX f32 reference of PyTorch nn.MultiheadAttention self-attention."""
    B, S, E = x.shape
    D = E // num_heads
    qkv = x @ params["wqkv"] + params["bqkv"][0]
    q, k, v = qkv[..., :E], qkv[..., E:2 * E], qkv[..., 2 * E:]

    def split(t):  # (B,S,E) -> (B,H,S,D)
        return t.reshape(B, S, num_heads, D).transpose(0, 2, 1, 3)

    qh, kh, vh = split(q), split(k), split(v)
    scores = jnp.einsum("bhqd,bhkd->bhqk", qh, kh) / jnp.sqrt(jnp.float32(D))
    attn = jax.nn.softmax(scores, axis=-1)
    ctx = jnp.einsum("bhqk,bhkd->bhqd", attn, vh)
    ctx = ctx.transpose(0, 2, 1, 3).reshape(B, S, E)
    return ctx @ params["wo"] + params["bo"][0]


def init_params(key, embed_dim):
    """Deterministic synthetic parameters matching nn.MultiheadAttention shapes."""
    E = embed_dim
    k1, k2, k3, k4 = jax.random.split(key, 4)
    # PyTorch shapes: in_proj_weight (3E, E), in_proj_bias (3E,),
    #                 out_proj.weight (E, E), out_proj.bias (E,)
    in_proj_w = jax.random.normal(k1, (3 * E, E), jnp.float32) * (1.0 / jnp.sqrt(E))
    in_proj_b = jax.random.normal(k2, (3 * E,), jnp.float32) * 0.02
    out_w = jax.random.normal(k3, (E, E), jnp.float32) * (1.0 / jnp.sqrt(E))
    out_b = jax.random.normal(k4, (E,), jnp.float32) * 0.02
    # Pre-transpose + fuse Q/K/V so the kernel computes y = x @ W + b directly.
    return {
        "wqkv": in_proj_w.T,                 # (E, 3E) = [Wq.T | Wk.T | Wv.T]
        "bqkv": in_proj_b.reshape(1, 3 * E),
        "wo": out_w.T,                       # (E, E)
        "bo": out_b.reshape(1, E),
    }


if __name__ == "__main__":
    EMBED_DIM = 32
    NUM_HEADS = 4
    B, S = 2, 8

    root = jax.random.PRNGKey(0)
    k_x, k_p = jax.random.split(root)
    x = jax.random.normal(k_x, (B, S, EMBED_DIM), jnp.float32)
    params = init_params(k_p, EMBED_DIM)

    out = dynamic_hierarchical_self_attention(x, params, num_heads=NUM_HEADS)
    out = jax.block_until_ready(out)

    ref = _reference_mha(x, params, NUM_HEADS)
    assert out.shape == (B, S, EMBED_DIM)
    assert out.dtype == jnp.float32
    # bf16 MXU operands + approx reciprocal -> relaxed tolerance vs f32 reference.
    max_err = float(jnp.max(jnp.abs(out - ref)))
    assert jnp.allclose(out, ref, atol=5e-2, rtol=5e-2), f"max abs err {max_err}"

    print("KERNEL_OK")
</pallas_src>

<mosaic_0001>
module attributes {stable_mosaic.version = 11 : i64} {
  func.func @_mha_self_attention_kernel(%arg0: i32, %arg1: memref<2x8x32xbf16, #tpu.memory_space<vmem>>, %arg2: memref<32x96xbf16, #tpu.memory_space<vmem>>, %arg3: memref<1x96xf32, #tpu.memory_space<vmem>>, %arg4: memref<32x32xbf16, #tpu.memory_space<vmem>>, %arg5: memref<1x32xf32, #tpu.memory_space<vmem>>, %arg6: memref<2x8x32xf32, #tpu.memory_space<vmem>>) attributes {dimension_semantics = [#tpu.dimension_semantics<parallel>], iteration_bounds = array<i64: 1>, scalar_prefetch = 0 : i64, scratch_operands = 0 : i64, tpu.core_type = #tpu.core_type<tc>, window_params = [{transform_indices = @transform_0, window_bounds = array<i64: 2, 8, 32>}, {pipeline_mode = #tpu.pipeline_mode<synchronous>, transform_indices = @transform_1, window_bounds = array<i64: 32, 96>}, {pipeline_mode = #tpu.pipeline_mode<synchronous>, transform_indices = @transform_2, window_bounds = array<i64: 1, 96>}, {pipeline_mode = #tpu.pipeline_mode<synchronous>, transform_indices = @transform_3, window_bounds = array<i64: 32, 32>}, {pipeline_mode = #tpu.pipeline_mode<synchronous>, transform_indices = @transform_4, window_bounds = array<i64: 1, 32>}, {transform_indices = @transform_5, window_bounds = array<i64: 2, 8, 32>}]} {
    %c0 = arith.constant 0 : index
    %c0_0 = arith.constant 0 : index
    %c0_1 = arith.constant 0 : index
    %0 = vector.load %arg1[%c0, %c0_0, %c0_1] : memref<2x8x32xbf16, #tpu.memory_space<vmem>>, vector<2x8x32xbf16>
    %1 = vector.shape_cast %0 : vector<2x8x32xbf16> to vector<16x32xbf16>
    %c0_2 = arith.constant 0 : index
    %c0_3 = arith.constant 0 : index
    %2 = vector.load %arg2[%c0_2, %c0_3] : memref<32x96xbf16, #tpu.memory_space<vmem>>, vector<32x96xbf16>
    %cst = arith.constant dense<0.000000e+00> : vector<16x96xf32>
    %3 = tpu.matmul %1, %2, %cst {dimension_numbers = #tpu.dot_dimension_numbers<[1], [0], [0], [1], [0, 0, 1, 1], [], []>} : vector<16x32xbf16>, vector<32x96xbf16>, vector<16x96xf32> -> vector<16x96xf32>
    %c0_4 = arith.constant 0 : index
    %c0_5 = arith.constant 0 : index
    %4 = vector.load %arg3[%c0_4, %c0_5] : memref<1x96xf32, #tpu.memory_space<vmem>>, vector<1x96xf32>
    %5 = vector.broadcast %4 : vector<1x96xf32> to vector<16x96xf32>
    %6 = arith.addf %3, %5 : vector<16x96xf32>
    %7 = vector.extract_strided_slice %6 {offsets = [0, 0], sizes = [16, 32], strides = [1, 1]} : vector<16x96xf32> to vector<16x32xf32>
    %8 = vector.extract_strided_slice %6 {offsets = [0, 32], sizes = [16, 32], strides = [1, 1]} : vector<16x96xf32> to vector<16x32xf32>
    %9 = vector.extract_strided_slice %6 {offsets = [0, 64], sizes = [16, 32], strides = [1, 1]} : vector<16x96xf32> to vector<16x32xf32>
    %10 = vector.shape_cast %7 : vector<16x32xf32> to vector<2x8x4x8xf32>
    %11 = tpu.transpose %10, [0, 2, 1, 3] : vector<2x8x4x8xf32> -> vector<2x4x8x8xf32>
    %12 = vector.shape_cast %11 : vector<2x4x8x8xf32> to vector<8x8x8xf32>
    %13 = arith.truncf %12 : vector<8x8x8xf32> to vector<8x8x8xbf16>
    %14 = vector.shape_cast %8 : vector<16x32xf32> to vector<2x8x4x8xf32>
    %15 = tpu.transpose %14, [0, 2, 1, 3] : vector<2x8x4x8xf32> -> vector<2x4x8x8xf32>
    %16 = vector.shape_cast %15 : vector<2x4x8x8xf32> to vector<8x8x8xf32>
    %17 = arith.truncf %16 : vector<8x8x8xf32> to vector<8x8x8xbf16>
    %18 = vector.shape_cast %9 : vector<16x32xf32> to vector<2x8x4x8xf32>
    %19 = tpu.transpose %18, [0, 2, 1, 3] : vector<2x8x4x8xf32> -> vector<2x4x8x8xf32>
    %20 = vector.shape_cast %19 : vector<2x4x8x8xf32> to vector<8x8x8xf32>
    %21 = arith.truncf %20 : vector<8x8x8xf32> to vector<8x8x8xbf16>
    "tpu.trace_start"() <{level = 10 : i32, message = "bqd,bkd->bqk"}> : () -> ()
    %cst_6 = arith.constant dense<0.000000e+00> : vector<8x8x8xf32>
    %22 = tpu.matmul %13, %17, %cst_6 {dimension_numbers = #tpu.dot_dimension_numbers<[2], [2], [1], [1], [0, 0, 0, 1, 1, 1], [0], [0]>} : vector<8x8x8xbf16>, vector<8x8x8xbf16>, vector<8x8x8xf32> -> vector<8x8x8xf32>
    "tpu.trace_stop"() : () -> ()
    %cst_7 = arith.constant 0.353553385 : f32
    %23 = vector.broadcast %cst_7 : f32 to vector<8x8x8xf32>
    %24 = arith.mulf %22, %23 : vector<8x8x8xf32>
    %cst_8 = arith.constant dense<0xFF800000> : vector<8x8xf32>
    %25 = vector.multi_reduction <maximumf>, %24, %cst_8 [2] : vector<8x8x8xf32> to vector<8x8xf32>
    %26 = vector.shape_cast %25 : vector<8x8xf32> to vector<8x8x1xf32>
    %27 = vector.broadcast %26 : vector<8x8x1xf32> to vector<8x8x8xf32>
    %28 = arith.subf %24, %27 : vector<8x8x8xf32>
    %29 = math.exp %28 : vector<8x8x8xf32>
    %cst_9 = arith.constant dense<0.000000e+00> : vector<8x8xf32>
    %30 = vector.multi_reduction <add>, %29, %cst_9 [2] : vector<8x8x8xf32> to vector<8x8xf32>
    %31 = vector.shape_cast %30 : vector<8x8xf32> to vector<8x8x1xf32>
    %32 = tpu.reciprocal %31 {approx = true} : vector<8x8x1xf32> -> vector<8x8x1xf32>
    %33 = vector.broadcast %32 : vector<8x8x1xf32> to vector<8x8x8xf32>
    %34 = arith.mulf %29, %33 : vector<8x8x8xf32>
    %35 = arith.truncf %34 : vector<8x8x8xf32> to vector<8x8x8xbf16>
    "tpu.trace_start"() <{level = 10 : i32, message = "bqk,bkd->bqd"}> : () -> ()
    %cst_10 = arith.constant dense<0.000000e+00> : vector<8x8x8xf32>
    %36 = tpu.matmul %35, %21, %cst_10 {dimension_numbers = #tpu.dot_dimension_numbers<[2], [1], [1], [2], [0, 0, 0, 1, 1, 2], [0], [0]>} : vector<8x8x8xbf16>, vector<8x8x8xbf16>, vector<8x8x8xf32> -> vector<8x8x8xf32>
    "tpu.trace_stop"() : () -> ()
    %37 = vector.shape_cast %36 : vector<8x8x8xf32> to vector<2x4x8x8xf32>
    %38 = tpu.transpose %37, [0, 2, 1, 3] : vector<2x4x8x8xf32> -> vector<2x8x4x8xf32>
    %39 = vector.shape_cast %38 : vector<2x8x4x8xf32> to vector<16x32xf32>
    %40 = arith.truncf %39 : vector<16x32xf32> to vector<16x32xbf16>
    %c0_11 = arith.constant 0 : index
    %c0_12 = arith.constant 0 : index
    %41 = vector.load %arg4[%c0_11, %c0_12] : memref<32x32xbf16, #tpu.memory_space<vmem>>, vector<32x32xbf16>
    %cst_13 = arith.constant dense<0.000000e+00> : vector<16x32xf32>
    %42 = tpu.matmul %40, %41, %cst_13 {dimension_numbers = #tpu.dot_dimension_numbers<[1], [0], [0], [1], [0, 0, 1, 1], [], []>} : vector<16x32xbf16>, vector<32x32xbf16>, vector<16x32xf32> -> vector<16x32xf32>
    %c0_14 = arith.constant 0 : index
    %c0_15 = arith.constant 0 : index
    %43 = vector.load %arg5[%c0_14, %c0_15] : memref<1x32xf32, #tpu.memory_space<vmem>>, vector<1x32xf32>
    %44 = vector.broadcast %43 : vector<1x32xf32> to vector<16x32xf32>
    %45 = arith.addf %42, %44 : vector<16x32xf32>
    %46 = vector.shape_cast %45 : vector<16x32xf32> to vector<2x8x32xf32>
    %c0_16 = arith.constant 0 : index
    %c0_17 = arith.constant 0 : index
    %c0_18 = arith.constant 0 : index
    %47 = vector.load %arg6[%c0_16, %c0_17, %c0_18] : memref<2x8x32xf32, #tpu.memory_space<vmem>>, vector<2x8x32xf32>
    tpu.vector_store %arg6[%c0_16, %c0_17, %c0_18], %46 {strides = array<i32>} : memref<2x8x32xf32, #tpu.memory_space<vmem>>, vector<2x8x32xf32>,
    return
  }
  func.func @transform_0(%arg0: i32) -> (i32, i32, i32) {
    %c0_i32 = arith.constant 0 : i32
    %c0_i32_0 = arith.constant 0 : i32
    %c0_i32_1 = arith.constant 0 : i32
    return %arg0, %c0_i32, %c0_i32_0 : i32, i32, i32
  }
  func.func @transform_1(%arg0: i32) -> (i32, i32) {
    %c0_i32 = arith.constant 0 : i32
    %c0_i32_0 = arith.constant 0 : i32
    %c0_i32_1 = arith.constant 0 : i32
    return %c0_i32, %c0_i32_0 : i32, i32
  }
  func.func @transform_2(%arg0: i32) -> (i32, i32) {
    %c0_i32 = arith.constant 0 : i32
    %c0_i32_0 = arith.constant 0 : i32
    %c0_i32_1 = arith.constant 0 : i32
    return %c0_i32, %c0_i32_0 : i32, i32
  }
  func.func @transform_3(%arg0: i32) -> (i32, i32) {
    %c0_i32 = arith.constant 0 : i32
    %c0_i32_0 = arith.constant 0 : i32
    %c0_i32_1 = arith.constant 0 : i32
    return %c0_i32, %c0_i32_0 : i32, i32
  }
  func.func @transform_4(%arg0: i32) -> (i32, i32) {
    %c0_i32 = arith.constant 0 : i32
    %c0_i32_0 = arith.constant 0 : i32
    %c0_i32_1 = arith.constant 0 : i32
    return %c0_i32, %c0_i32_0 : i32, i32
  }
  func.func @transform_5(%arg0: i32) -> (i32, i32, i32) {
    %c0_i32 = arith.constant 0 : i32
    %c0_i32_0 = arith.constant 0 : i32
    %c0_i32_1 = arith.constant 0 : i32
    return %arg0, %c0_i32, %c0_i32_0 : i32, i32, i32
  }
}

</mosaic_0001>

<llo_original>
// kernel: tpu_custom_call.1
$region0: #{tpu_custom_call.1}
  #allocation0 [shape = 'u32[]', space=smem, size = 0x4, offset = 0x4, fixed_abs, tag = 'smem constant byte address 0x4 - core index']
  #allocation1 [shape = 'u32[144,128]{1,0:T(1,128)}', space=vmem, size = 0x12000, scoped, tag = 'internal scratch']
  %s0 = inlined_call_operand.hbm [shape: bf16[2,8,32], index: 0, kind: input, shape index: {}]
  %s1 = inlined_call_operand.hbm [shape: bf16[32,96], index: 1, kind: input, shape index: {}]
  %s2 = inlined_call_operand.vmem [shape: f32[1,96], index: 2, kind: input, shape index: {}]
  %s3 = inlined_call_operand.hbm [shape: bf16[32,32], index: 3, kind: input, shape index: {}]
  %s4 = inlined_call_operand.vmem [shape: f32[1,32], index: 4, kind: input, shape index: {}]
  %s5 = inlined_call_operand.hbm [shape: f32[2,8,32], index: 5, kind: output, shape index: {}]
  %s6 = sld [smem:[#allocation0]]
  $region42: #{tpu_custom_call.1} parent=0
    _
  %s8 = ssub.s32 1, %s6
  %s9 = scalar_select 0, %s8, %s6
  $region1: #{tpu_custom_call.1} parent=0
    #allocation2 [shape = 'u8[4096]{0}', space=vmem, size = 0x1000, scoped, tag = 'input window, operand 0, single buffered']
    #allocation3 [shape = 's32[1]{0}', space=sflag, size = 0x4, scoped, tag = 'scoped memory for tpu_custom_call.1']
    #allocation4 [shape = 's32[1]{0}', space=sflag, size = 0x4, scoped, tag = 'scoped memory for tpu_custom_call.1']
    #allocation5 [shape = 'u8[8192]{0}', space=vmem, size = 0x2000, scoped, tag = 'input window, operand 1, single buffered']
    #allocation6 [shape = 's32[1]{0}', space=sflag, size = 0x4, scoped, tag = 'scoped memory for tpu_custom_call.1']
    #allocation7 [shape = 'u8[8192]{0}', space=vmem, size = 0x2000, scoped, tag = 'input window, operand 3, single buffered']
    #allocation8 [shape = 'u8[8192]{0}', space=vmem, size = 0x2000, scoped, tag = 'output window, operand 0, single buffered']
    %10 = vsyncpa [#allocation3], 0
    %11 = vsyncpa [#allocation6], 0
    %12 = vsyncpa [#allocation4], 0
    // Predicated region
    $region2: #{tpu_custom_call.1} parent=1 // pred_check
      _
    $region3: #{tpu_custom_call.1} parent=1 // pred_check_branch
      %14 = sbr.rel (0) target = $region5
    $region4: #{tpu_custom_call.1} parent=1 // pred_region
      %s16 = ssub.s32 128, 128
      %17 = vsyncadd [#allocation3], %s16
      %s18 = sshll.u32 [#allocation2], 4
      %s19 = int_to_ptr.vmem [resolvable:$true] %s18
      %24 = dma.hbm_to_vmem [thread:$0]  %s0, 128, %s19, [#allocation3], 64, 64, 4
    $region5: #{tpu_custom_call.1} parent=1 // pred_fallthru
      _
    // Predicated region
    $region6: #{tpu_custom_call.1} parent=1 // pred_check
      _
    $region7: #{tpu_custom_call.1} parent=1 // pred_check_branch
      %26 = sbr.rel (0) target = $region9
    $region8: #{tpu_custom_call.1} parent=1 // pred_region
      %s28 = ssub.s32 256, 256
      %29 = vsyncadd [#allocation6], %s28
      %s30 = sshll.u32 [#allocation5], 4
      %s31 = int_to_ptr.vmem [resolvable:$true] %s30
      %36 = dma.hbm_to_vmem [thread:$0]  %s1, 256, %s31, [#allocation6], 64, 64, 4
    $region9: #{tpu_custom_call.1} parent=1 // pred_fallthru
      _
    // Predicated region
    $region10: #{tpu_custom_call.1} parent=1 // pred_check
      _
    $region11: #{tpu_custom_call.1} parent=1 // pred_check_branch
      %38 = sbr.rel (0) target = $region13
    $region12: #{tpu_custom_call.1} parent=1 // pred_region
      _
    $region13: #{tpu_custom_call.1} parent=1 // pred_fallthru
      _
    // Predicated region
    $region14: #{tpu_custom_call.1} parent=1 // pred_check
      _
    $region15: #{tpu_custom_call.1} parent=1 // pred_check_branch
      %40 = sbr.rel (0) target = $region17
    $region16: #{tpu_custom_call.1} parent=1 // pred_region
      %s42 = ssub.s32 256, 256
      %43 = vsyncadd [#allocation6], %s42
      %s44 = sshll.u32 [#allocation7], 4
      %s45 = int_to_ptr.vmem [resolvable:$true] %s44
      %50 = dma.hbm_to_vmem [thread:$0]  %s3, 256, %s45, [#allocation6], 64, 64, 4
    $region17: #{tpu_custom_call.1} parent=1 // pred_fallthru
      _
    // Predicated region
    $region18: #{tpu_custom_call.1} parent=1 // pred_check
      _
    $region19: #{tpu_custom_call.1} parent=1 // pred_check_branch
      %52 = sbr.rel (0) target = $region21
    $region20: #{tpu_custom_call.1} parent=1 // pred_region
      _
    $region21: #{tpu_custom_call.1} parent=1 // pred_fallthru
      _
    // Predicated region
    $region22: #{tpu_custom_call.1} parent=1 // pred_check
      _
    $region23: #{tpu_custom_call.1} parent=1 // pred_check_branch
      %54 = sbr.rel (0) target = $region25
    $region24: #{tpu_custom_call.1} parent=1 // pred_region
      %55 = dma.done [#allocation3], 128
    $region25: #{tpu_custom_call.1} parent=1 // pred_fallthru
      _
    // Predicated region
    $region26: #{tpu_custom_call.1} parent=1 // pred_check
      _
    $region27: #{tpu_custom_call.1} parent=1 // pred_check_branch
      %57 = sbr.rel (0) target = $region29
    $region28: #{tpu_custom_call.1} parent=1 // pred_region
      %58 = dma.done [#allocation6], 256
    $region29: #{tpu_custom_call.1} parent=1 // pred_fallthru
      _
    // Predicated region
    $region30: #{tpu_custom_call.1} parent=1 // pred_check
      _
    $region31: #{tpu_custom_call.1} parent=1 // pred_check_branch
      %60 = sbr.rel (0) target = $region33
    $region32: #{tpu_custom_call.1} parent=1 // pred_region
      %61 = dma.done [#allocation6], 256
    $region33: #{tpu_custom_call.1} parent=1 // pred_fallthru
      _
    %v63 = vld [vmem:[#allocation2] sm:$0xf]
    %v64 = vld [vmem:[#allocation2 + $0x4] sm:$0xf]
    %v65 = vld [vmem:[#allocation5] sm:$0xf]
    %v66 = vld [vmem:[#allocation5 + $0x4] sm:$0xf]
    %v67 = vld [vmem:[#allocation5 + $0x8] sm:$0xf]
    %v68 = vld [vmem:[#allocation5 + $0xc] sm:$0xf]
    %v69 = vld [vmem:[%s2] sm:$0x1]
    %v71 = vlaneseq
    %v72 = vshrl.u32 %v71, 7
    %v73 = vsub.s32 0, %v72
    %v74 = vrot.slane %v69, %v73
    %v78 = vunpack.c.l.b16 %v63
    %v79 = vunpack.c.l.b16 %v64
    %v80 = vpack.c.b16 %v79, %v78
    %v85 = vunpack.c.l.b16 %v65
    %v86 = vunpack.c.l.b16 %v66
    %v87 = vunpack.c.l.b16 %v67
    %v88 = vunpack.c.l.b16 %v68
    %v89 = vpack.c.b16 %v86, %v85
    %v90 = vpack.c.b16 %v88, %v87
    %vm93 = vcmask 261120
    %v95 = vsel %vm93, %v80, 0
    %97 = vmatprep.subr.bf16.mxu0 0
    %98 = vmatpush1.bf16.msra.mxu0 0
    %99 = vmatprep.subr.bf16.mxu0 0
    %100 = vmatpush1.bf16.msra.mxu0 0
    %101 = vmatprep.subr.bf16.mxu0 0
    %102 = vmatpush1.bf16.msra.mxu0 0
    %103 = vmatprep.subr.bf16.mxu0 0
    %104 = vmatpush1.bf16.msra.mxu0 0
    %105 = vmatprep.subr.bf16.mxu0 0
    %106 = vmatpush1.bf16.msra.mxu0 0
    %107 = vmatprep.subr.bf16.mxu0 0
    %108 = vmatpush1.bf16.msra.mxu0 0
    %109 = vmatprep.subr.bf16.mxu0 0
    %110 = vmatpush1.bf16.msra.mxu0 %v90
    %111 = vmatprep.subr.bf16.mxu0 0
    %112 = vmatpush1.bf16.msra.mxu0 %v89
    %113 = vmatprep.subr.bf16.mxu0 0
    %114 = vmatpush2.bf16.msra.mxu0 0
    %115 = vmatprep.subr.bf16.mxu0 0
    %116 = vmatpush2.bf16.msra.mxu0 0
    %117 = vmatprep.subr.bf16.mxu0 0
    %118 = vmatpush2.bf16.msra.mxu0 0
    %119 = vmatprep.subr.bf16.mxu0 0
    %120 = vmatpush2.bf16.msra.mxu0 0
    %121 = vmatprep.subr.bf16.mxu0 0
    %122 = vmatpush2.bf16.msra.mxu0 0
    %123 = vmatprep.subr.bf16.mxu0 0
    %124 = vmatpush2.bf16.msra.mxu0 0
    %125 = vmatprep.subr.bf16.mxu0 0
    %126 = vmatpush2.bf16.msra.mxu0 0
    %127 = vmatprep.subr.bf16.mxu0 0
    %128 = vmatpush2.bf16.msra.mxu0 0
    %129 = vmatprep.mubr.bf16.mxu0 0
    %130 = vmatmul.mubr.bf16.gmra.mxu0 %v95
    %v131 = vpop.f32.mrf.mxu0
    %v132 = vadd.f32 %v74, %v131
    %v133 = vpop.f32.mrf.mxu0
    %v134 = vpop.f32.mrf.mxu0
    %v135 = vadd.f32 %v74, %v134
    %v136 = vpop.f32.mrf.mxu0
    %137 = vdwg.mxu0
    %140 = vrot.lane.b32.xlu0 %v132, 120
    %v141 = vpop.permute.xlu0 %140
    %142 = vrot.lane.b32.xlu0 %v135, 120
    %v143 = vpop.permute.xlu0 %142
    %146 = vrot.lane.b32.xlu0 %v132, 112
    %v147 = vpop.permute.xlu0 %146
    %148 = vrot.lane.b32.xlu0 %v135, 112
    %v149 = vpop.permute.xlu0 %148
    %152 = vrot.lane.b32.xlu0 %v132, 104
    %v153 = vpop.permute.xlu0 %152
    %154 = vrot.lane.b32.xlu0 %v135, 104
    %v155 = vpop.permute.xlu0 %154
    %v158 = vcombine.low %v132, %v147
    %v159 = vcombine.high %v132, %v147
    %v161 = vunpack.c.l.s4 1983009808
    %v162 = vunpack.c.0.s8 %v161
    %v163 = vlaneseq
    %v164 = vshrl.u32 %v163, 7
    %v165 = vsub.s32 %v162, %v164
    %v166 = vrot.slane %v158, %v165
    %v168 = vunpack.c.l.s4 1983009808
    %v169 = vunpack.c.0.s8 %v168
    %v170 = vlaneseq
    %v171 = vshrl.u32 %v170, 7
    %v172 = vsub.s32 %v169, %v171
    %v173 = vrot.slane %v159, %v172
    %v174 = vcombine.low %v141, %v153
    %v175 = vcombine.high %v141, %v153
    %v177 = vunpack.c.l.s4 1983009808
    %v178 = vunpack.c.0.s8 %v177
    %v179 = vlaneseq
    %v180 = vshrl.u32 %v179, 7
    %v181 = vsub.s32 %v178, %v180
    %v182 = vrot.slane %v174, %v181
    %v184 = vunpack.c.l.s4 1983009808
    %v185 = vunpack.c.0.s8 %v184
    %v186 = vlaneseq
    %v187 = vshrl.u32 %v186, 7
    %v188 = vsub.s32 %v185, %v187
    %v189 = vrot.slane %v175, %v188
    %v190 = vcombine.low %v166, %v182
    %v191 = vcombine.high %v166, %v182
    %v193 = vunpack.c.l.s4 1934713408
    %v194 = vunpack.c.0.s8 %v193
    %v195 = vlaneseq
    %v196 = vshrl.u32 %v195, 7
    %v197 = vsub.s32 %v194, %v196
    %v198 = vrot.slane %v190, %v197
    %v200 = vunpack.c.l.s4 1934713408
    %v201 = vunpack.c.0.s8 %v200
    %v202 = vlaneseq
    %v203 = vshrl.u32 %v202, 7
    %v204 = vsub.s32 %v201, %v203
    %v205 = vrot.slane %v191, %v204
    %v206 = vcombine.low %v173, %v189
    %v207 = vcombine.high %v173, %v189
    %v209 = vunpack.c.l.s4 1934713408
    %v210 = vunpack.c.0.s8 %v209
    %v211 = vlaneseq
    %v212 = vshrl.u32 %v211, 7
    %v213 = vsub.s32 %v210, %v212
    %v214 = vrot.slane %v206, %v213
    %v216 = vunpack.c.l.s4 1934713408
    %v217 = vunpack.c.0.s8 %v216
    %v218 = vlaneseq
    %v219 = vshrl.u32 %v218, 7
    %v220 = vsub.s32 %v217, %v219
    %v221 = vrot.slane %v207, %v220
    %v222 = vcombine.high %v198, 0.0
    %v223 = vcombine.high %v205, 0.0
    %v224 = vcombine.high %v214, 0.0
    %v225 = vcombine.high %v221, 0.0
    %v226 = vcombine.low %v135, %v149
    %v227 = vcombine.high %v135, %v149
    %v229 = vunpack.c.l.s4 1983009808
    %v230 = vunpack.c.0.s8 %v229
    %v231 = vlaneseq
    %v232 = vshrl.u32 %v231, 7
    %v233 = vsub.s32 %v230, %v232
    %v234 = vrot.slane %v226, %v233
    %v236 = vunpack.c.l.s4 1983009808
    %v237 = vunpack.c.0.s8 %v236
    %v238 = vlaneseq
    %v239 = vshrl.u32 %v238, 7
    %v240 = vsub.s32 %v237, %v239
    %v241 = vrot.slane %v227, %v240
    %v242 = vcombine.low %v143, %v155
    %v243 = vcombine.high %v143, %v155
    %v245 = vunpack.c.l.s4 1983009808
    %v246 = vunpack.c.0.s8 %v245
    %v247 = vlaneseq
    %v248 = vshrl.u32 %v247, 7
    %v249 = vsub.s32 %v246, %v248
    %v250 = vrot.slane %v242, %v249
    %v252 = vunpack.c.l.s4 1983009808
    %v253 = vunpack.c.0.s8 %v252
    %v254 = vlaneseq
    %v255 = vshrl.u32 %v254, 7
    %v256 = vsub.s32 %v253, %v255
    %v257 = vrot.slane %v243, %v256
    %v258 = vcombine.low %v234, %v250
    %v259 = vcombine.high %v234, %v250
    %v261 = vunpack.c.l.s4 1934713408
    %v262 = vunpack.c.0.s8 %v261
    %v263 = vlaneseq
    %v264 = vshrl.u32 %v263, 7
    %v265 = vsub.s32 %v262, %v264
    %v266 = vrot.slane %v258, %v265
    %v268 = vunpack.c.l.s4 1934713408
    %v269 = vunpack.c.0.s8 %v268
    %v270 = vlaneseq
    %v271 = vshrl.u32 %v270, 7
    %v272 = vsub.s32 %v269, %v271
    %v273 = vrot.slane %v259, %v272
    %v274 = vcombine.low %v241, %v257
    %v275 = vcombine.high %v241, %v257
    %v277 = vunpack.c.l.s4 1934713408
    %v278 = vunpack.c.0.s8 %v277
    %v279 = vlaneseq
    %v280 = vshrl.u32 %v279, 7
    %v281 = vsub.s32 %v278, %v280
    %v282 = vrot.slane %v274, %v281
    %v284 = vunpack.c.l.s4 1934713408
    %v285 = vunpack.c.0.s8 %v284
    %v286 = vlaneseq
    %v287 = vshrl.u32 %v286, 7
    %v288 = vsub.s32 %v285, %v287
    %v289 = vrot.slane %v275, %v288
    %v290 = vcombine.high %v266, 0.0
    %v291 = vcombine.high %v273, 0.0
    %v292 = vcombine.high %v282, 0.0
    %v293 = vcombine.high %v289, 0.0
    %v294 = vcombine.low %v198, %v205
    %v296 = vunpack.c.l.s4 1983009808
    %v297 = vunpack.c.0.s8 %v296
    %v298 = vlaneseq
    %v299 = vshrl.u32 %v298, 7
    %v300 = vsub.s32 %v297, %v299
    %v301 = vrot.slane %v294, %v300
    %v302 = vcombine.low %v222, %v223
    %v304 = vunpack.c.l.s4 1983009808
    %v305 = vunpack.c.0.s8 %v304
    %v306 = vlaneseq
    %v307 = vshrl.u32 %v306, 7
    %v308 = vsub.s32 %v305, %v307
    %v309 = vrot.slane %v302, %v308
    %v310 = vcombine.low %v214, %v221
    %v312 = vunpack.c.l.s4 1983009808
    %v313 = vunpack.c.0.s8 %v312
    %v314 = vlaneseq
    %v315 = vshrl.u32 %v314, 7
    %v316 = vsub.s32 %v313, %v315
    %v317 = vrot.slane %v310, %v316
    %v318 = vcombine.low %v224, %v225
    %v320 = vunpack.c.l.s4 1983009808
    %v321 = vunpack.c.0.s8 %v320
    %v322 = vlaneseq
    %v323 = vshrl.u32 %v322, 7
    %v324 = vsub.s32 %v321, %v323
    %v325 = vrot.slane %v318, %v324
    %v326 = vcombine.low %v301, %v309
    %v327 = vcombine.high %v301, %v309
    %v329 = vunpack.c.l.s4 1934713408
    %v330 = vunpack.c.0.s8 %v329
    %v331 = vlaneseq
    %v332 = vshrl.u32 %v331, 7
    %v333 = vsub.s32 %v330, %v332
    %v334 = vrot.slane %v326, %v333
    %v336 = vunpack.c.l.s4 1934713408
    %v337 = vunpack.c.0.s8 %v336
    %v338 = vlaneseq
    %v339 = vshrl.u32 %v338, 7
    %v340 = vsub.s32 %v337, %v339
    %v341 = vrot.slane %v327, %v340
    %v342 = vcombine.low %v317, %v325
    %v343 = vcombine.high %v317, %v325
    %v345 = vunpack.c.l.s4 1934713408
    %v346 = vunpack.c.0.s8 %v345
    %v347 = vlaneseq
    %v348 = vshrl.u32 %v347, 7
    %v349 = vsub.s32 %v346, %v348
    %v350 = vrot.slane %v342, %v349
    %v352 = vunpack.c.l.s4 1934713408
    %v353 = vunpack.c.0.s8 %v352
    %v354 = vlaneseq
    %v355 = vshrl.u32 %v354, 7
    %v356 = vsub.s32 %v353, %v355
    %v357 = vrot.slane %v343, %v356
    %v358 = vcombine.low %v334, %v350
    %v359 = vcombine.high %v334, %v350
    %v360 = vcombine.low %v341, %v357
    %v361 = vcombine.high %v341, %v357
    %v362 = vcombine.low %v266, %v273
    %v364 = vunpack.c.l.s4 1983009808
    %v365 = vunpack.c.0.s8 %v364
    %v366 = vlaneseq
    %v367 = vshrl.u32 %v366, 7
    %v368 = vsub.s32 %v365, %v367
    %v369 = vrot.slane %v362, %v368
    %v370 = vcombine.low %v290, %v291
    %v372 = vunpack.c.l.s4 1983009808
    %v373 = vunpack.c.0.s8 %v372
    %v374 = vlaneseq
    %v375 = vshrl.u32 %v374, 7
    %v376 = vsub.s32 %v373, %v375
    %v377 = vrot.slane %v370, %v376
    %v378 = vcombine.low %v282, %v289
    %v380 = vunpack.c.l.s4 1983009808
    %v381 = vunpack.c.0.s8 %v380
    %v382 = vlaneseq
    %v383 = vshrl.u32 %v382, 7
    %v384 = vsub.s32 %v381, %v383
    %v385 = vrot.slane %v378, %v384
    %v386 = vcombine.low %v292, %v293
    %v388 = vunpack.c.l.s4 1983009808
    %v389 = vunpack.c.0.s8 %v388
    %v390 = vlaneseq
    %v391 = vshrl.u32 %v390, 7
    %v392 = vsub.s32 %v389, %v391
    %v393 = vrot.slane %v386, %v392
    %v394 = vcombine.low %v369, %v377
    %v395 = vcombine.high %v369, %v377
    %v397 = vunpack.c.l.s4 1934713408
    %v398 = vunpack.c.0.s8 %v397
    %v399 = vlaneseq
    %v400 = vshrl.u32 %v399, 7
    %v401 = vsub.s32 %v398, %v400
    %v402 = vrot.slane %v394, %v401
    %v404 = vunpack.c.l.s4 1934713408
    %v405 = vunpack.c.0.s8 %v404
    %v406 = vlaneseq
    %v407 = vshrl.u32 %v406, 7
    %v408 = vsub.s32 %v405, %v407
    %v409 = vrot.slane %v395, %v408
    %v410 = vcombine.low %v385, %v393
    %v411 = vcombine.high %v385, %v393
    %v413 = vunpack.c.l.s4 1934713408
    %v414 = vunpack.c.0.s8 %v413
    %v415 = vlaneseq
    %v416 = vshrl.u32 %v415, 7
    %v417 = vsub.s32 %v414, %v416
    %v418 = vrot.slane %v410, %v417
    %v420 = vunpack.c.l.s4 1934713408
    %v421 = vunpack.c.0.s8 %v420
    %v422 = vlaneseq
    %v423 = vshrl.u32 %v422, 7
    %v424 = vsub.s32 %v421, %v423
    %v425 = vrot.slane %v411, %v424
    %v426 = vcombine.low %v402, %v418
    %v427 = vcombine.high %v402, %v418
    %v428 = vcombine.low %v409, %v425
    %v429 = vcombine.high %v409, %v425
    %v430 = vpack.c.bf16 %v358, %v358
    %v431 = vpack.c.bf16 %v359, %v359
    %v432 = vpack.c.bf16 %v360, %v360
    %v433 = vpack.c.bf16 %v361, %v361
    %v434 = vpack.c.bf16 %v426, %v426
    %v435 = vpack.c.bf16 %v427, %v427
    %v436 = vpack.c.bf16 %v428, %v428
    %v437 = vpack.c.bf16 %v429, %v429
    %438 = vrot.lane.b32.xlu0 %v132, 96
    %v439 = vpop.permute.xlu0 %438
    %440 = vrot.lane.b32.xlu0 %v135, 96
    %v441 = vpop.permute.xlu0 %440
    %442 = vrot.lane.b32.xlu0 %v141, 96
    %v443 = vpop.permute.xlu0 %442
    %444 = vrot.lane.b32.xlu0 %v143, 96
    %v445 = vpop.permute.xlu0 %444
    %446 = vrot.lane.b32.xlu0 %v147, 96
    %v447 = vpop.permute.xlu0 %446
    %448 = vrot.lane.b32.xlu0 %v149, 96
    %v449 = vpop.permute.xlu0 %448
    %450 = vrot.lane.b32.xlu0 %v153, 96
    %v451 = vpop.permute.xlu0 %450
    %452 = vrot.lane.b32.xlu0 %v155, 96
    %v453 = vpop.permute.xlu0 %452
    %v462 = vcombine.low %v439, %v447
    %v463 = vcombine.high %v439, %v447
    %v465 = vunpack.c.l.s4 1983009808
    %v466 = vunpack.c.0.s8 %v465
    %v467 = vlaneseq
    %v468 = vshrl.u32 %v467, 7
    %v469 = vsub.s32 %v466, %v468
    %v470 = vrot.slane %v462, %v469
    %v472 = vunpack.c.l.s4 1983009808
    %v473 = vunpack.c.0.s8 %v472
    %v474 = vlaneseq
    %v475 = vshrl.u32 %v474, 7
    %v476 = vsub.s32 %v473, %v475
    %v477 = vrot.slane %v463, %v476
    %v478 = vcombine.low %v443, %v451
    %v479 = vcombine.high %v443, %v451
    %v481 = vunpack.c.l.s4 1983009808
    %v482 = vunpack.c.0.s8 %v481
    %v483 = vlaneseq
    %v484 = vshrl.u32 %v483, 7
    %v485 = vsub.s32 %v482, %v484
    %v486 = vrot.slane %v478, %v485
    %v488 = vunpack.c.l.s4 1983009808
    %v489 = vunpack.c.0.s8 %v488
    %v490 = vlaneseq
    %v491 = vshrl.u32 %v490, 7
    %v492 = vsub.s32 %v489, %v491
    %v493 = vrot.slane %v479, %v492
    %v494 = vcombine.low %v470, %v486
    %v495 = vcombine.high %v470, %v486
    %v497 = vunpack.c.l.s4 1934713408
    %v498 = vunpack.c.0.s8 %v497
    %v499 = vlaneseq
    %v500 = vshrl.u32 %v499, 7
    %v501 = vsub.s32 %v498, %v500
    %v502 = vrot.slane %v494, %v501
    %v504 = vunpack.c.l.s4 1934713408
    %v505 = vunpack.c.0.s8 %v504
    %v506 = vlaneseq
    %v507 = vshrl.u32 %v506, 7
    %v508 = vsub.s32 %v505, %v507
    %v509 = vrot.slane %v495, %v508
    %v510 = vcombine.low %v477, %v493
    %v511 = vcombine.high %v477, %v493
    %v513 = vunpack.c.l.s4 1934713408
    %v514 = vunpack.c.0.s8 %v513
    %v515 = vlaneseq
    %v516 = vshrl.u32 %v515, 7
    %v517 = vsub.s32 %v514, %v516
    %v518 = vrot.slane %v510, %v517
    %v520 = vunpack.c.l.s4 1934713408
    %v521 = vunpack.c.0.s8 %v520
    %v522 = vlaneseq
    %v523 = vshrl.u32 %v522, 7
    %v524 = vsub.s32 %v521, %v523
    %v525 = vrot.slane %v511, %v524
    %v526 = vcombine.high %v502, 0.0
    %v527 = vcombine.high %v509, 0.0
    %v528 = vcombine.high %v518, 0.0
    %v529 = vcombine.high %v525, 0.0
    %v530 = vcombine.low %v441, %v449
    %v531 = vcombine.high %v441, %v449
    %v533 = vunpack.c.l.s4 1983009808
    %v534 = vunpack.c.0.s8 %v533
    %v535 = vlaneseq
    %v536 = vshrl.u32 %v535, 7
    %v537 = vsub.s32 %v534, %v536
    %v538 = vrot.slane %v530, %v537
    %v540 = vunpack.c.l.s4 1983009808
    %v541 = vunpack.c.0.s8 %v540
    %v542 = vlaneseq
    %v543 = vshrl.u32 %v542, 7
    %v544 = vsub.s32 %v541, %v543
    %v545 = vrot.slane %v531, %v544
    %v546 = vcombine.low %v445, %v453
    %v547 = vcombine.high %v445, %v453
    %v549 = vunpack.c.l.s4 1983009808
    %v550 = vunpack.c.0.s8 %v549
    %v551 = vlaneseq
    %v552 = vshrl.u32 %v551, 7
    %v553 = vsub.s32 %v550, %v552
    %v554 = vrot.slane %v546, %v553
    %v556 = vunpack.c.l.s4 1983009808
    %v557 = vunpack.c.0.s8 %v556
    %v558 = vlaneseq
    %v559 = vshrl.u32 %v558, 7
    %v560 = vsub.s32 %v557, %v559
    %v561 = vrot.slane %v547, %v560
    %v562 = vcombine.low %v538, %v554
    %v563 = vcombine.high %v538, %v554
    %v565 = vunpack.c.l.s4 1934713408
    %v566 = vunpack.c.0.s8 %v565
    %v567 = vlaneseq
    %v568 = vshrl.u32 %v567, 7
    %v569 = vsub.s32 %v566, %v568
    %v570 = vrot.slane %v562, %v569
    %v572 = vunpack.c.l.s4 1934713408
    %v573 = vunpack.c.0.s8 %v572
    %v574 = vlaneseq
    %v575 = vshrl.u32 %v574, 7
    %v576 = vsub.s32 %v573, %v575
    %v577 = vrot.slane %v563, %v576
    %v578 = vcombine.low %v545, %v561
    %v579 = vcombine.high %v545, %v561
    %v581 = vunpack.c.l.s4 1934713408
    %v582 = vunpack.c.0.s8 %v581
    %v583 = vlaneseq
    %v584 = vshrl.u32 %v583, 7
    %v585 = vsub.s32 %v582, %v584
    %v586 = vrot.slane %v578, %v585
    %v588 = vunpack.c.l.s4 1934713408
    %v589 = vunpack.c.0.s8 %v588
    %v590 = vlaneseq
    %v591 = vshrl.u32 %v590, 7
    %v592 = vsub.s32 %v589, %v591
    %v593 = vrot.slane %v579, %v592
    %v594 = vcombine.high %v570, 0.0
    %v595 = vcombine.high %v577, 0.0
    %v596 = vcombine.high %v586, 0.0
    %v597 = vcombine.high %v593, 0.0
    %v598 = vcombine.low %v502, %v509
    %v600 = vunpack.c.l.s4 1983009808
    %v601 = vunpack.c.0.s8 %v600
    %v602 = vlaneseq
    %v603 = vshrl.u32 %v602, 7
    %v604 = vsub.s32 %v601, %v603
    %v605 = vrot.slane %v598, %v604
    %v606 = vcombine.low %v526, %v527
    %v608 = vunpack.c.l.s4 1983009808
    %v609 = vunpack.c.0.s8 %v608
    %v610 = vlaneseq
    %v611 = vshrl.u32 %v610, 7
    %v612 = vsub.s32 %v609, %v611
    %v613 = vrot.slane %v606, %v612
    %v614 = vcombine.low %v518, %v525
    %v616 = vunpack.c.l.s4 1983009808
    %v617 = vunpack.c.0.s8 %v616
    %v618 = vlaneseq
    %v619 = vshrl.u32 %v618, 7
    %v620 = vsub.s32 %v617, %v619
    %v621 = vrot.slane %v614, %v620
    %v622 = vcombine.low %v528, %v529
    %v624 = vunpack.c.l.s4 1983009808
    %v625 = vunpack.c.0.s8 %v624
    %v626 = vlaneseq
    %v627 = vshrl.u32 %v626, 7
    %v628 = vsub.s32 %v625, %v627
    %v629 = vrot.slane %v622, %v628
    %v630 = vcombine.low %v605, %v613
    %v631 = vcombine.high %v605, %v613
    %v633 = vunpack.c.l.s4 1934713408
    %v634 = vunpack.c.0.s8 %v633
    %v635 = vlaneseq
    %v636 = vshrl.u32 %v635, 7
    %v637 = vsub.s32 %v634, %v636
    %v638 = vrot.slane %v630, %v637
    %v640 = vunpack.c.l.s4 1934713408
    %v641 = vunpack.c.0.s8 %v640
    %v642 = vlaneseq
    %v643 = vshrl.u32 %v642, 7
    %v644 = vsub.s32 %v641, %v643
    %v645 = vrot.slane %v631, %v644
    %v646 = vcombine.low %v621, %v629
    %v647 = vcombine.high %v621, %v629
    %v649 = vunpack.c.l.s4 1934713408
    %v650 = vunpack.c.0.s8 %v649
    %v651 = vlaneseq
    %v652 = vshrl.u32 %v651, 7
    %v653 = vsub.s32 %v650, %v652
    %v654 = vrot.slane %v646, %v653
    %v656 = vunpack.c.l.s4 1934713408
    %v657 = vunpack.c.0.s8 %v656
    %v658 = vlaneseq
    %v659 = vshrl.u32 %v658, 7
    %v660 = vsub.s32 %v657, %v659
    %v661 = vrot.slane %v647, %v660
    %v662 = vcombine.low %v638, %v654
    %v663 = vcombine.high %v638, %v654
    %v664 = vcombine.low %v645, %v661
    %v665 = vcombine.high %v645, %v661
    %v666 = vcombine.low %v570, %v577
    %v668 = vunpack.c.l.s4 1983009808
    %v669 = vunpack.c.0.s8 %v668
    %v670 = vlaneseq
    %v671 = vshrl.u32 %v670, 7
    %v672 = vsub.s32 %v669, %v671
    %v673 = vrot.slane %v666, %v672
    %v674 = vcombine.low %v594, %v595
    %v676 = vunpack.c.l.s4 1983009808
    %v677 = vunpack.c.0.s8 %v676
    %v678 = vlaneseq
    %v679 = vshrl.u32 %v678, 7
    %v680 = vsub.s32 %v677, %v679
    %v681 = vrot.slane %v674, %v680
    %v682 = vcombine.low %v586, %v593
    %v684 = vunpack.c.l.s4 1983009808
    %v685 = vunpack.c.0.s8 %v684
    %v686 = vlaneseq
    %v687 = vshrl.u32 %v686, 7
    %v688 = vsub.s32 %v685, %v687
    %v689 = vrot.slane %v682, %v688
    %v690 = vcombine.low %v596, %v597
    %v692 = vunpack.c.l.s4 1983009808
    %v693 = vunpack.c.0.s8 %v692
    %v694 = vlaneseq
    %v695 = vshrl.u32 %v694, 7
    %v696 = vsub.s32 %v693, %v695
    %v697 = vrot.slane %v690, %v696
    %v698 = vcombine.low %v673, %v681
    %v699 = vcombine.high %v673, %v681
    %v701 = vunpack.c.l.s4 1934713408
    %v702 = vunpack.c.0.s8 %v701
    %v703 = vlaneseq
    %v704 = vshrl.u32 %v703, 7
    %v705 = vsub.s32 %v702, %v704
    %v706 = vrot.slane %v698, %v705
    %v708 = vunpack.c.l.s4 1934713408
    %v709 = vunpack.c.0.s8 %v708
    %v710 = vlaneseq
    %v711 = vshrl.u32 %v710, 7
    %v712 = vsub.s32 %v709, %v711
    %v713 = vrot.slane %v699, %v712
    %v714 = vcombine.low %v689, %v697
    %v715 = vcombine.high %v689, %v697
    %v717 = vunpack.c.l.s4 1934713408
    %v718 = vunpack.c.0.s8 %v717
    %v719 = vlaneseq
    %v720 = vshrl.u32 %v719, 7
    %v721 = vsub.s32 %v718, %v720
    %v722 = vrot.slane %v714, %v721
    %v724 = vunpack.c.l.s4 1934713408
    %v725 = vunpack.c.0.s8 %v724
    %v726 = vlaneseq
    %v727 = vshrl.u32 %v726, 7
    %v728 = vsub.s32 %v725, %v727
    %v729 = vrot.slane %v715, %v728
    %v730 = vcombine.low %v706, %v722
    %v731 = vcombine.high %v706, %v722
    %v732 = vcombine.low %v713, %v729
    %v733 = vcombine.high %v713, %v729
    %v734 = vpack.c.bf16 %v662, %v662
    %v735 = vpack.c.bf16 %v663, %v663
    %v736 = vpack.c.bf16 %v664, %v664
    %v737 = vpack.c.bf16 %v665, %v665
    %v738 = vpack.c.bf16 %v730, %v730
    %v739 = vpack.c.bf16 %v731, %v731
    %v740 = vpack.c.bf16 %v732, %v732
    %v741 = vpack.c.bf16 %v733, %v733
    %742 = vrot.lane.b32.xlu0 %v132, 64
    %v743 = vpop.permute.xlu0 %742
    %744 = vrot.lane.b32.xlu0 %v135, 64
    %v745 = vpop.permute.xlu0 %744
    %746 = vrot.lane.b32.xlu0 %v141, 64
    %v747 = vpop.permute.xlu0 %746
    %748 = vrot.lane.b32.xlu0 %v143, 64
    %v749 = vpop.permute.xlu0 %748
    %750 = vrot.lane.b32.xlu0 %v147, 64
    %v751 = vpop.permute.xlu0 %750
    %752 = vrot.lane.b32.xlu0 %v149, 64
    %v753 = vpop.permute.xlu0 %752
    %754 = vrot.lane.b32.xlu0 %v153, 64
    %v755 = vpop.permute.xlu0 %754
    %756 = vrot.lane.b32.xlu0 %v155, 64
    %v757 = vpop.permute.xlu0 %756
    %v766 = vcombine.low %v743, %v751
    %v767 = vcombine.high %v743, %v751
    %v769 = vunpack.c.l.s4 1983009808
    %v770 = vunpack.c.0.s8 %v769
    %v771 = vlaneseq
    %v772 = vshrl.u32 %v771, 7
    %v773 = vsub.s32 %v770, %v772
    %v774 = vrot.slane %v766, %v773
    %v776 = vunpack.c.l.s4 1983009808
    %v777 = vunpack.c.0.s8 %v776
    %v778 = vlaneseq
    %v779 = vshrl.u32 %v778, 7
    %v780 = vsub.s32 %v777, %v779
    %v781 = vrot.slane %v767, %v780
    %v782 = vcombine.low %v747, %v755
    %v783 = vcombine.high %v747, %v755
    %v785 = vunpack.c.l.s4 1983009808
    %v786 = vunpack.c.0.s8 %v785
    %v787 = vlaneseq
    %v788 = vshrl.u32 %v787, 7
    %v789 = vsub.s32 %v786, %v788
    %v790 = vrot.slane %v782, %v789
    %v792 = vunpack.c.l.s4 1983009808
    %v793 = vunpack.c.0.s8 %v792
    %v794 = vlaneseq
    %v795 = vshrl.u32 %v794, 7
    %v796 = vsub.s32 %v793, %v795
    %v797 = vrot.slane %v783, %v796
    %v798 = vcombine.low %v774, %v790
    %v799 = vcombine.high %v774, %v790
    %v801 = vunpack.c.l.s4 1934713408
    %v802 = vunpack.c.0.s8 %v801
    %v803 = vlaneseq
    %v804 = vshrl.u32 %v803, 7
    %v805 = vsub.s32 %v802, %v804
    %v806 = vrot.slane %v798, %v805
    %v808 = vunpack.c.l.s4 1934713408
    %v809 = vunpack.c.0.s8 %v808
    %v810 = vlaneseq
    %v811 = vshrl.u32 %v810, 7
    %v812 = vsub.s32 %v809, %v811
    %v813 = vrot.slane %v799, %v812
    %v814 = vcombine.low %v781, %v797
    %v815 = vcombine.high %v781, %v797
    %v817 = vunpack.c.l.s4 1934713408
    %v818 = vunpack.c.0.s8 %v817
    %v819 = vlaneseq
    %v820 = vshrl.u32 %v819, 7
    %v821 = vsub.s32 %v818, %v820
    %v822 = vrot.slane %v814, %v821
    %v824 = vunpack.c.l.s4 1934713408
    %v825 = vunpack.c.0.s8 %v824
    %v826 = vlaneseq
    %v827 = vshrl.u32 %v826, 7
    %v828 = vsub.s32 %v825, %v827
    %v829 = vrot.slane %v815, %v828
    %v830 = vcombine.high %v806, 0.0
    %v831 = vcombine.high %v813, 0.0
    %v832 = vcombine.high %v822, 0.0
    %v833 = vcombine.high %v829, 0.0
    %v834 = vcombine.low %v745, %v753
    %v835 = vcombine.high %v745, %v753
    %v837 = vunpack.c.l.s4 1983009808
    %v838 = vunpack.c.0.s8 %v837
    %v839 = vlaneseq
    %v840 = vshrl.u32 %v839, 7
    %v841 = vsub.s32 %v838, %v840
    %v842 = vrot.slane %v834, %v841
    %v844 = vunpack.c.l.s4 1983009808
    %v845 = vunpack.c.0.s8 %v844
    %v846 = vlaneseq
    %v847 = vshrl.u32 %v846, 7
    %v848 = vsub.s32 %v845, %v847
    %v849 = vrot.slane %v835, %v848
    %v850 = vcombine.low %v749, %v757
    %v851 = vcombine.high %v749, %v757
    %v853 = vunpack.c.l.s4 1983009808
    %v854 = vunpack.c.0.s8 %v853
    %v855 = vlaneseq
    %v856 = vshrl.u32 %v855, 7
    %v857 = vsub.s32 %v854, %v856
    %v858 = vrot.slane %v850, %v857
    %v860 = vunpack.c.l.s4 1983009808
    %v861 = vunpack.c.0.s8 %v860
    %v862 = vlaneseq
    %v863 = vshrl.u32 %v862, 7
    %v864 = vsub.s32 %v861, %v863
    %v865 = vrot.slane %v851, %v864
    %v866 = vcombine.low %v842, %v858
    %v867 = vcombine.high %v842, %v858
    %v869 = vunpack.c.l.s4 1934713408
    %v870 = vunpack.c.0.s8 %v869
    %v871 = vlaneseq
    %v872 = vshrl.u32 %v871, 7
    %v873 = vsub.s32 %v870, %v872
    %v874 = vrot.slane %v866, %v873
    %v876 = vunpack.c.l.s4 1934713408
    %v877 = vunpack.c.0.s8 %v876
    %v878 = vlaneseq
    %v879 = vshrl.u32 %v878, 7
    %v880 = vsub.s32 %v877, %v879
    %v881 = vrot.slane %v867, %v880
    %v882 = vcombine.low %v849, %v865
    %v883 = vcombine.high %v849, %v865
    %v885 = vunpack.c.l.s4 1934713408
    %v886 = vunpack.c.0.s8 %v885
    %v887 = vlaneseq
    %v888 = vshrl.u32 %v887, 7
    %v889 = vsub.s32 %v886, %v888
    %v890 = vrot.slane %v882, %v889
    %v892 = vunpack.c.l.s4 1934713408
    %v893 = vunpack.c.0.s8 %v892
    %v894 = vlaneseq
    %v895 = vshrl.u32 %v894, 7
    %v896 = vsub.s32 %v893, %v895
    %v897 = vrot.slane %v883, %v896
    %v898 = vcombine.high %v874, 0.0
    %v899 = vcombine.high %v881, 0.0
    %v900 = vcombine.high %v890, 0.0
    %v901 = vcombine.high %v897, 0.0
    %v902 = vcombine.low %v806, %v813
    %v904 = vunpack.c.l.s4 1983009808
    %v905 = vunpack.c.0.s8 %v904
    %v906 = vlaneseq
    %v907 = vshrl.u32 %v906, 7
    %v908 = vsub.s32 %v905, %v907
    %v909 = vrot.slane %v902, %v908
    %v910 = vcombine.low %v830, %v831
    %v912 = vunpack.c.l.s4 1983009808
    %v913 = vunpack.c.0.s8 %v912
    %v914 = vlaneseq
    %v915 = vshrl.u32 %v914, 7
    %v916 = vsub.s32 %v913, %v915
    %v917 = vrot.slane %v910, %v916
    %v918 = vcombine.low %v822, %v829
    %v920 = vunpack.c.l.s4 1983009808
    %v921 = vunpack.c.0.s8 %v920
    %v922 = vlaneseq
    %v923 = vshrl.u32 %v922, 7
    %v924 = vsub.s32 %v921, %v923
    %v925 = vrot.slane %v918, %v924
    %v926 = vcombine.low %v832, %v833
    %v928 = vunpack.c.l.s4 1983009808
    %v929 = vunpack.c.0.s8 %v928
    %v930 = vlaneseq
    %v931 = vshrl.u32 %v930, 7
    %v932 = vsub.s32 %v929, %v931
    %v933 = vrot.slane %v926, %v932
    %v934 = vcombine.low %v909, %v917
    %v935 = vcombine.high %v909, %v917
    %v937 = vunpack.c.l.s4 1934713408
    %v938 = vunpack.c.0.s8 %v937
    %v939 = vlaneseq
    %v940 = vshrl.u32 %v939, 7
    %v941 = vsub.s32 %v938, %v940
    %v942 = vrot.slane %v934, %v941
    %v944 = vunpack.c.l.s4 1934713408
    %v945 = vunpack.c.0.s8 %v944
    %v946 = vlaneseq
    %v947 = vshrl.u32 %v946, 7
    %v948 = vsub.s32 %v945, %v947
    %v949 = vrot.slane %v935, %v948
    %v950 = vcombine.low %v925, %v933
    %v951 = vcombine.high %v925, %v933
    %v953 = vunpack.c.l.s4 1934713408
    %v954 = vunpack.c.0.s8 %v953
    %v955 = vlaneseq
    %v956 = vshrl.u32 %v955, 7
    %v957 = vsub.s32 %v954, %v956
    %v958 = vrot.slane %v950, %v957
    %v960 = vunpack.c.l.s4 1934713408
    %v961 = vunpack.c.0.s8 %v960
    %v962 = vlaneseq
    %v963 = vshrl.u32 %v962, 7
    %v964 = vsub.s32 %v961, %v963
    %v965 = vrot.slane %v951, %v964
    %v966 = vcombine.low %v942, %v958
    %v967 = vcombine.high %v942, %v958
    %v968 = vcombine.low %v949, %v965
    %v969 = vcombine.high %v949, %v965
    %v970 = vcombine.low %v874, %v881
    %v972 = vunpack.c.l.s4 1983009808
    %v973 = vunpack.c.0.s8 %v972
    %v974 = vlaneseq
    %v975 = vshrl.u32 %v974, 7
    %v976 = vsub.s32 %v973, %v975
    %v977 = vrot.slane %v970, %v976
    %v978 = vcombine.low %v898, %v899
    %v980 = vunpack.c.l.s4 1983009808
    %v981 = vunpack.c.0.s8 %v980
    %v982 = vlaneseq
    %v983 = vshrl.u32 %v982, 7
    %v984 = vsub.s32 %v981, %v983
    %v985 = vrot.slane %v978, %v984
    %v986 = vcombine.low %v890, %v897
    %v988 = vunpack.c.l.s4 1983009808
    %v989 = vunpack.c.0.s8 %v988
    %v990 = vlaneseq
    %v991 = vshrl.u32 %v990, 7
    %v992 = vsub.s32 %v989, %v991
    %v993 = vrot.slane %v986, %v992
    %v994 = vcombine.low %v900, %v901
    %v996 = vunpack.c.l.s4 1983009808
    %v997 = vunpack.c.0.s8 %v996
    %v998 = vlaneseq
    %v999 = vshrl.u32 %v998, 7
    %v1000 = vsub.s32 %v997, %v999
    %v1001 = vrot.slane %v994, %v1000
    %v1002 = vcombine.low %v977, %v985
    %v1003 = vcombine.high %v977, %v985
    %v1005 = vunpack.c.l.s4 1934713408
    %v1006 = vunpack.c.0.s8 %v1005
    %v1007 = vlaneseq
    %v1008 = vshrl.u32 %v1007, 7
    %v1009 = vsub.s32 %v1006, %v1008
    %v1010 = vrot.slane %v1002, %v1009
    %v1012 = vunpack.c.l.s4 1934713408
    %v1013 = vunpack.c.0.s8 %v1012
    %v1014 = vlaneseq
    %v1015 = vshrl.u32 %v1014, 7
    %v1016 = vsub.s32 %v1013, %v1015
    %v1017 = vrot.slane %v1003, %v1016
    %v1018 = vcombine.low %v993, %v1001
    %v1019 = vcombine.high %v993, %v1001
    %v1021 = vunpack.c.l.s4 1934713408
    %v1022 = vunpack.c.0.s8 %v1021
    %v1023 = vlaneseq
    %v1024 = vshrl.u32 %v1023, 7
    %v1025 = vsub.s32 %v1022, %v1024
    %v1026 = vrot.slane %v1018, %v1025
    %v1028 = vunpack.c.l.s4 1934713408
    %v1029 = vunpack.c.0.s8 %v1028
    %v1030 = vlaneseq
    %v1031 = vshrl.u32 %v1030, 7
    %v1032 = vsub.s32 %v1029, %v1031
    %v1033 = vrot.slane %v1019, %v1032
    %v1034 = vcombine.low %v1010, %v1026
    %v1035 = vcombine.high %v1010, %v1026
    %v1036 = vcombine.low %v1017, %v1033
    %v1037 = vcombine.high %v1017, %v1033
    %v1038 = vpack.c.bf16 %v966, %v966
    %v1039 = vpack.c.bf16 %v967, %v967
    %v1040 = vpack.c.bf16 %v968, %v968
    %v1041 = vpack.c.bf16 %v969, %v969
    %v1042 = vpack.c.bf16 %v1034, %v1034
    %v1043 = vpack.c.bf16 %v1035, %v1035
    %v1044 = vpack.c.bf16 %v1036, %v1036
    %v1045 = vpack.c.bf16 %v1037, %v1037
    %vm1046 = vcmask 64512
    %v1048 = vsel %vm1046, %v430, 0
    %v1051 = vsel %vm1046, %v734, 0
    %1053 = vmatprep.subr.bf16.mxu0 0
    %1054 = vmatpush1.bf16.xpose.msra.mxu0 0
    %1055 = vmatprep.subr.bf16.mxu0 0
    %1056 = vmatpush1.bf16.xpose.msra.mxu0 0
    %1057 = vmatprep.subr.bf16.mxu0 0
    %1058 = vmatpush1.bf16.xpose.msra.mxu0 0
    %1059 = vmatprep.subr.bf16.mxu0 0
    %1060 = vmatpush1.bf16.xpose.msra.mxu0 0
    %1061 = vmatprep.subr.bf16.mxu0 0
    %1062 = vmatpush1.bf16.xpose.msra.mxu0 0
    %1063 = vmatprep.subr.bf16.mxu0 0
    %1064 = vmatpush1.bf16.xpose.msra.mxu0 0
    %1065 = vmatprep.subr.bf16.mxu0 0
    %1066 = vmatpush1.bf16.xpose.msra.mxu0 0
    %1067 = vmatprep.subr.bf16.mxu0 0
    %1068 = vmatpush1.bf16.xpose.msra.mxu0 %v1051
    %1069 = vmatprep.subr.bf16.mxu0 0
    %1070 = vmatpush2.bf16.xpose.msra.mxu0 0
    %1071 = vmatprep.subr.bf16.mxu0 0
    %1072 = vmatpush2.bf16.xpose.msra.mxu0 0
    %1073 = vmatprep.subr.bf16.mxu0 0
    %1074 = vmatpush2.bf16.xpose.msra.mxu0 0
    %1075 = vmatprep.subr.bf16.mxu0 0
    %1076 = vmatpush2.bf16.xpose.msra.mxu0 0
    %1077 = vmatprep.subr.bf16.mxu0 0
    %1078 = vmatpush2.bf16.xpose.msra.mxu0 0
    %1079 = vmatprep.subr.bf16.mxu0 0
    %1080 = vmatpush2.bf16.xpose.msra.mxu0 0
    %1081 = vmatprep.subr.bf16.mxu0 0
    %1082 = vmatpush2.bf16.xpose.msra.mxu0 0
    %1083 = vmatprep.subr.bf16.mxu0 0
    %1084 = vmatpush2.bf16.xpose.msra.mxu0 0
    %1085 = vmatprep.mubr.bf16.mxu0 0
    %1086 = vmatmul.mubr.bf16.gmra.mxu0 %v1048
    %v1087 = vpop.f32.mrf.mxu0
    %v1088 = vadd.f32 0.0, %v1087
    %v1089 = vpop.f32.mrf.mxu0
    %v1090 = vpop.f32.mrf.mxu0
    %v1091 = vpop.f32.mrf.mxu0
    %1092 = vdwg.mxu0
    %v1094 = vsel %vm1046, %v431, 0
    %v1097 = vsel %vm1046, %v735, 0
    %1099 = vmatprep.subr.bf16.mxu0 0
    %1100 = vmatpush1.bf16.xpose.msra.mxu0 0
    %1101 = vmatprep.subr.bf16.mxu0 0
    %1102 = vmatpush1.bf16.xpose.msra.mxu0 0
    %1103 = vmatprep.subr.bf16.mxu0 0
    %1104 = vmatpush1.bf16.xpose.msra.mxu0 0
    %1105 = vmatprep.subr.bf16.mxu0 0
    %1106 = vmatpush1.bf16.xpose.msra.mxu0 0
    %1107 = vmatprep.subr.bf16.mxu0 0
    %1108 = vmatpush1.bf16.xpose.msra.mxu0 0
    %1109 = vmatprep.subr.bf16.mxu0 0
    %1110 = vmatpush1.bf16.xpose.msra.mxu0 0
    %1111 = vmatprep.subr.bf16.mxu0 0
    %1112 = vmatpush1.bf16.xpose.msra.mxu0 0
    %1113 = vmatprep.subr.bf16.mxu0 0
    %1114 = vmatpush1.bf16.xpose.msra.mxu0 %v1097
    %1115 = vmatprep.subr.bf16.mxu0 0
    %1116 = vmatpush2.bf16.xpose.msra.mxu0 0
    %1117 = vmatprep.subr.bf16.mxu0 0
    %1118 = vmatpush2.bf16.xpose.msra.mxu0 0
    %1119 = vmatprep.subr.bf16.mxu0 0
    %1120 = vmatpush2.bf16.xpose.msra.mxu0 0
    %1121 = vmatprep.subr.bf16.mxu0 0
    %1122 = vmatpush2.bf16.xpose.msra.mxu0 0
    %1123 = vmatprep.subr.bf16.mxu0 0
    %1124 = vmatpush2.bf16.xpose.msra.mxu0 0
    %1125 = vmatprep.subr.bf16.mxu0 0
    %1126 = vmatpush2.bf16.xpose.msra.mxu0 0
    %1127 = vmatprep.subr.bf16.mxu0 0
    %1128 = vmatpush2.bf16.xpose.msra.mxu0 0
    %1129 = vmatprep.subr.bf16.mxu0 0
    %1130 = vmatpush2.bf16.xpose.msra.mxu0 0
    %1131 = vmatprep.mubr.bf16.mxu0 0
    %1132 = vmatmul.mubr.bf16.gmra.mxu0 %v1094
    %v1133 = vpop.f32.mrf.mxu0
    %v1134 = vadd.f32 0.0, %v1133
    %v1135 = vpop.f32.mrf.mxu0
    %v1136 = vpop.f32.mrf.mxu0
    %v1137 = vpop.f32.mrf.mxu0
    %1138 = vdwg.mxu0
    %v1140 = vsel %vm1046, %v432, 0
    %v1143 = vsel %vm1046, %v736, 0
    %1145 = vmatprep.subr.bf16.mxu0 0
    %1146 = vmatpush1.bf16.xpose.msra.mxu0 0
    %1147 = vmatprep.subr.bf16.mxu0 0
    %1148 = vmatpush1.bf16.xpose.msra.mxu0 0
    %1149 = vmatprep.subr.bf16.mxu0 0
    %1150 = vmatpush1.bf16.xpose.msra.mxu0 0
    %1151 = vmatprep.subr.bf16.mxu0 0
    %1152 = vmatpush1.bf16.xpose.msra.mxu0 0
    %1153 = vmatprep.subr.bf16.mxu0 0
    %1154 = vmatpush1.bf16.xpose.msra.mxu0 0
    %1155 = vmatprep.subr.bf16.mxu0 0
    %1156 = vmatpush1.bf16.xpose.msra.mxu0 0
    %1157 = vmatprep.subr.bf16.mxu0 0
    %1158 = vmatpush1.bf16.xpose.msra.mxu0 0
    %1159 = vmatprep.subr.bf16.mxu0 0
    %1160 = vmatpush1.bf16.xpose.msra.mxu0 %v1143
    %1161 = vmatprep.subr.bf16.mxu0 0
    %1162 = vmatpush2.bf16.xpose.msra.mxu0 0
    %1163 = vmatprep.subr.bf16.mxu0 0
    %1164 = vmatpush2.bf16.xpose.msra.mxu0 0
    %1165 = vmatprep.subr.bf16.mxu0 0
    %1166 = vmatpush2.bf16.xpose.msra.mxu0 0
    %1167 = vmatprep.subr.bf16.mxu0 0
    %1168 = vmatpush2.bf16.xpose.msra.mxu0 0
    %1169 = vmatprep.subr.bf16.mxu0 0
    %1170 = vmatpush2.bf16.xpose.msra.mxu0 0
    %1171 = vmatprep.subr.bf16.mxu0 0
    %1172 = vmatpush2.bf16.xpose.msra.mxu0 0
    %1173 = vmatprep.subr.bf16.mxu0 0
    %1174 = vmatpush2.bf16.xpose.msra.mxu0 0
    %1175 = vmatprep.subr.bf16.mxu0 0
    %1176 = vmatpush2.bf16.xpose.msra.mxu0 0
    %1177 = vmatprep.mubr.bf16.mxu0 0
    %1178 = vmatmul.mubr.bf16.gmra.mxu0 %v1140
    %v1179 = vpop.f32.mrf.mxu0
    %v1180 = vadd.f32 0.0, %v1179
    %v1181 = vpop.f32.mrf.mxu0
    %v1182 = vpop.f32.mrf.mxu0
    %v1183 = vpop.f32.mrf.mxu0
    %1184 = vdwg.mxu0
    %v1186 = vsel %vm1046, %v433, 0
    %v1189 = vsel %vm1046, %v737, 0
    %1191 = vmatprep.subr.bf16.mxu0 0
    %1192 = vmatpush1.bf16.xpose.msra.mxu0 0
    %1193 = vmatprep.subr.bf16.mxu0 0
    %1194 = vmatpush1.bf16.xpose.msra.mxu0 0
    %1195 = vmatprep.subr.bf16.mxu0 0
    %1196 = vmatpush1.bf16.xpose.msra.mxu0 0
    %1197 = vmatprep.subr.bf16.mxu0 0
    %1198 = vmatpush1.bf16.xpose.msra.mxu0 0
    %1199 = vmatprep.subr.bf16.mxu0 0
    %1200 = vmatpush1.bf16.xpose.msra.mxu0 0
    %1201 = vmatprep.subr.bf16.mxu0 0
    %1202 = vmatpush1.bf16.xpose.msra.mxu0 0
    %1203 = vmatprep.subr.bf16.mxu0 0
    %1204 = vmatpush1.bf16.xpose.msra.mxu0 0
    %1205 = vmatprep.subr.bf16.mxu0 0
    %1206 = vmatpush1.bf16.xpose.msra.mxu0 %v1189
    %1207 = vmatprep.subr.bf16.mxu0 0
    %1208 = vmatpush2.bf16.xpose.msra.mxu0 0
    %1209 = vmatprep.subr.bf16.mxu0 0
    %1210 = vmatpush2.bf16.xpose.msra.mxu0 0
    %1211 = vmatprep.subr.bf16.mxu0 0
    %1212 = vmatpush2.bf16.xpose.msra.mxu0 0
    %1213 = vmatprep.subr.bf16.mxu0 0
    %1214 = vmatpush2.bf16.xpose.msra.mxu0 0
    %1215 = vmatprep.subr.bf16.mxu0 0
    %1216 = vmatpush2.bf16.xpose.msra.mxu0 0
    %1217 = vmatprep.subr.bf16.mxu0 0
    %1218 = vmatpush2.bf16.xpose.msra.mxu0 0
    %1219 = vmatprep.subr.bf16.mxu0 0
    %1220 = vmatpush2.bf16.xpose.msra.mxu0 0
    %1221 = vmatprep.subr.bf16.mxu0 0
    %1222 = vmatpush2.bf16.xpose.msra.mxu0 0
    %1223 = vmatprep.mubr.bf16.mxu0 0
    %1224 = vmatmul.mubr.bf16.gmra.mxu0 %v1186
    %v1225 = vpop.f32.mrf.mxu0
    %v1226 = vadd.f32 0.0, %v1225
    %v1227 = vpop.f32.mrf.mxu0
    %v1228 = vpop.f32.mrf.mxu0
    %v1229 = vpop.f32.mrf.mxu0
    %1230 = vdwg.mxu0
    %v1232 = vsel %vm1046, %v434, 0
    %v1235 = vsel %vm1046, %v738, 0
    %1237 = vmatprep.subr.bf16.mxu0 0
    %1238 = vmatpush1.bf16.xpose.msra.mxu0 0
    %1239 = vmatprep.subr.bf16.mxu0 0
    %1240 = vmatpush1.bf16.xpose.msra.mxu0 0
    %1241 = vmatprep.subr.bf16.mxu0 0
    %1242 = vmatpush1.bf16.xpose.msra.mxu0 0
    %1243 = vmatprep.subr.bf16.mxu0 0
    %1244 = vmatpush1.bf16.xpose.msra.mxu0 0
    %1245 = vmatprep.subr.bf16.mxu0 0
    %1246 = vmatpush1.bf16.xpose.msra.mxu0 0
    %1247 = vmatprep.subr.bf16.mxu0 0
    %1248 = vmatpush1.bf16.xpose.msra.mxu0 0
    %1249 = vmatprep.subr.bf16.mxu0 0
    %1250 = vmatpush1.bf16.xpose.msra.mxu0 0
    %1251 = vmatprep.subr.bf16.mxu0 0
    %1252 = vmatpush1.bf16.xpose.msra.mxu0 %v1235
    %1253 = vmatprep.subr.bf16.mxu0 0
    %1254 = vmatpush2.bf16.xpose.msra.mxu0 0
    %1255 = vmatprep.subr.bf16.mxu0 0
    %1256 = vmatpush2.bf16.xpose.msra.mxu0 0
    %1257 = vmatprep.subr.bf16.mxu0 0
    %1258 = vmatpush2.bf16.xpose.msra.mxu0 0
    %1259 = vmatprep.subr.bf16.mxu0 0
    %1260 = vmatpush2.bf16.xpose.msra.mxu0 0
    %1261 = vmatprep.subr.bf16.mxu0 0
    %1262 = vmatpush2.bf16.xpose.msra.mxu0 0
    %1263 = vmatprep.subr.bf16.mxu0 0
    %1264 = vmatpush2.bf16.xpose.msra.mxu0 0
    %1265 = vmatprep.subr.bf16.mxu0 0
    %1266 = vmatpush2.bf16.xpose.msra.mxu0 0
    %1267 = vmatprep.subr.bf16.mxu0 0
    %1268 = vmatpush2.bf16.xpose.msra.mxu0 0
    %1269 = vmatprep.mubr.bf16.mxu0 0
    %1270 = vmatmul.mubr.bf16.gmra.mxu0 %v1232
    %v1271 = vpop.f32.mrf.mxu0
    %v1272 = vadd.f32 0.0, %v1271
    %v1273 = vpop.f32.mrf.mxu0
    %v1274 = vpop.f32.mrf.mxu0
    %v1275 = vpop.f32.mrf.mxu0
    %1276 = vdwg.mxu0
    %v1278 = vsel %vm1046, %v435, 0
    %v1281 = vsel %vm1046, %v739, 0
    %1283 = vmatprep.subr.bf16.mxu0 0
    %1284 = vmatpush1.bf16.xpose.msra.mxu0 0
    %1285 = vmatprep.subr.bf16.mxu0 0
    %1286 = vmatpush1.bf16.xpose.msra.mxu0 0
    %1287 = vmatprep.subr.bf16.mxu0 0
    %1288 = vmatpush1.bf16.xpose.msra.mxu0 0
    %1289 = vmatprep.subr.bf16.mxu0 0
    %1290 = vmatpush1.bf16.xpose.msra.mxu0 0
    %1291 = vmatprep.subr.bf16.mxu0 0
    %1292 = vmatpush1.bf16.xpose.msra.mxu0 0
    %1293 = vmatprep.subr.bf16.mxu0 0
    %1294 = vmatpush1.bf16.xpose.msra.mxu0 0
    %1295 = vmatprep.subr.bf16.mxu0 0
    %1296 = vmatpush1.bf16.xpose.msra.mxu0 0
    %1297 = vmatprep.subr.bf16.mxu0 0
    %1298 = vmatpush1.bf16.xpose.msra.mxu0 %v1281
    %1299 = vmatprep.subr.bf16.mxu0 0
    %1300 = vmatpush2.bf16.xpose.msra.mxu0 0
    %1301 = vmatprep.subr.bf16.mxu0 0
    %1302 = vmatpush2.bf16.xpose.msra.mxu0 0
    %1303 = vmatprep.subr.bf16.mxu0 0
    %1304 = vmatpush2.bf16.xpose.msra.mxu0 0
    %1305 = vmatprep.subr.bf16.mxu0 0
    %1306 = vmatpush2.bf16.xpose.msra.mxu0 0
    %1307 = vmatprep.subr.bf16.mxu0 0
    %1308 = vmatpush2.bf16.xpose.msra.mxu0 0
    %1309 = vmatprep.subr.bf16.mxu0 0
    %1310 = vmatpush2.bf16.xpose.msra.mxu0 0
    %1311 = vmatprep.subr.bf16.mxu0 0
    %1312 = vmatpush2.bf16.xpose.msra.mxu0 0
    %1313 = vmatprep.subr.bf16.mxu0 0
    %1314 = vmatpush2.bf16.xpose.msra.mxu0 0
    %1315 = vmatprep.mubr.bf16.mxu0 0
    %1316 = vmatmul.mubr.bf16.gmra.mxu0 %v1278
    %v1317 = vpop.f32.mrf.mxu0
    %v1318 = vadd.f32 0.0, %v1317
    %v1319 = vpop.f32.mrf.mxu0
    %v1320 = vpop.f32.mrf.mxu0
    %v1321 = vpop.f32.mrf.mxu0
    %1322 = vdwg.mxu0
    %v1324 = vsel %vm1046, %v436, 0
    %v1327 = vsel %vm1046, %v740, 0
    %1329 = vmatprep.subr.bf16.mxu0 0
    %1330 = vmatpush1.bf16.xpose.msra.mxu0 0
    %1331 = vmatprep.subr.bf16.mxu0 0
    %1332 = vmatpush1.bf16.xpose.msra.mxu0 0
    %1333 = vmatprep.subr.bf16.mxu0 0
    %1334 = vmatpush1.bf16.xpose.msra.mxu0 0
    %1335 = vmatprep.subr.bf16.mxu0 0
    %1336 = vmatpush1.bf16.xpose.msra.mxu0 0
    %1337 = vmatprep.subr.bf16.mxu0 0
    %1338 = vmatpush1.bf16.xpose.msra.mxu0 0
    %1339 = vmatprep.subr.bf16.mxu0 0
    %1340 = vmatpush1.bf16.xpose.msra.mxu0 0
    %1341 = vmatprep.subr.bf16.mxu0 0
    %1342 = vmatpush1.bf16.xpose.msra.mxu0 0
    %1343 = vmatprep.subr.bf16.mxu0 0
    %1344 = vmatpush1.bf16.xpose.msra.mxu0 %v1327
    %1345 = vmatprep.subr.bf16.mxu0 0
    %1346 = vmatpush2.bf16.xpose.msra.mxu0 0
    %1347 = vmatprep.subr.bf16.mxu0 0
    %1348 = vmatpush2.bf16.xpose.msra.mxu0 0
    %1349 = vmatprep.subr.bf16.mxu0 0
    %1350 = vmatpush2.bf16.xpose.msra.mxu0 0
    %1351 = vmatprep.subr.bf16.mxu0 0
    %1352 = vmatpush2.bf16.xpose.msra.mxu0 0
    %1353 = vmatprep.subr.bf16.mxu0 0
    %1354 = vmatpush2.bf16.xpose.msra.mxu0 0
    %1355 = vmatprep.subr.bf16.mxu0 0
    %1356 = vmatpush2.bf16.xpose.msra.mxu0 0
    %1357 = vmatprep.subr.bf16.mxu0 0
    %1358 = vmatpush2.bf16.xpose.msra.mxu0 0
    %1359 = vmatprep.subr.bf16.mxu0 0
    %1360 = vmatpush2.bf16.xpose.msra.mxu0 0
    %1361 = vmatprep.mubr.bf16.mxu0 0
    %1362 = vmatmul.mubr.bf16.gmra.mxu0 %v1324
    %v1363 = vpop.f32.mrf.mxu0
    %v1364 = vadd.f32 0.0, %v1363
    %v1365 = vpop.f32.mrf.mxu0
    %v1366 = vpop.f32.mrf.mxu0
    %v1367 = vpop.f32.mrf.mxu0
    %1368 = vdwg.mxu0
    %v1370 = vsel %vm1046, %v437, 0
    %v1373 = vsel %vm1046, %v741, 0
    %1375 = vmatprep.subr.bf16.mxu0 0
    %1376 = vmatpush1.bf16.xpose.msra.mxu0 0
    %1377 = vmatprep.subr.bf16.mxu0 0
    %1378 = vmatpush1.bf16.xpose.msra.mxu0 0
    %1379 = vmatprep.subr.bf16.mxu0 0
    %1380 = vmatpush1.bf16.xpose.msra.mxu0 0
    %1381 = vmatprep.subr.bf16.mxu0 0
    %1382 = vmatpush1.bf16.xpose.msra.mxu0 0
    %1383 = vmatprep.subr.bf16.mxu0 0
    %1384 = vmatpush1.bf16.xpose.msra.mxu0 0
    %1385 = vmatprep.subr.bf16.mxu0 0
    %1386 = vmatpush1.bf16.xpose.msra.mxu0 0
    %1387 = vmatprep.subr.bf16.mxu0 0
    %1388 = vmatpush1.bf16.xpose.msra.mxu0 0
    %1389 = vmatprep.subr.bf16.mxu0 0
    %1390 = vmatpush1.bf16.xpose.msra.mxu0 %v1373
    %1391 = vmatprep.subr.bf16.mxu0 0
    %1392 = vmatpush2.bf16.xpose.msra.mxu0 0
    %1393 = vmatprep.subr.bf16.mxu0 0
    %1394 = vmatpush2.bf16.xpose.msra.mxu0 0
    %1395 = vmatprep.subr.bf16.mxu0 0
    %1396 = vmatpush2.bf16.xpose.msra.mxu0 0
    %1397 = vmatprep.subr.bf16.mxu0 0
    %1398 = vmatpush2.bf16.xpose.msra.mxu0 0
    %1399 = vmatprep.subr.bf16.mxu0 0
    %1400 = vmatpush2.bf16.xpose.msra.mxu0 0
    %1401 = vmatprep.subr.bf16.mxu0 0
    %1402 = vmatpush2.bf16.xpose.msra.mxu0 0
    %1403 = vmatprep.subr.bf16.mxu0 0
    %1404 = vmatpush2.bf16.xpose.msra.mxu0 0
    %1405 = vmatprep.subr.bf16.mxu0 0
    %1406 = vmatpush2.bf16.xpose.msra.mxu0 0
    %1407 = vmatprep.mubr.bf16.mxu0 0
    %1408 = vmatmul.mubr.bf16.gmra.mxu0 %v1370
    %v1409 = vpop.f32.mrf.mxu0
    %v1410 = vadd.f32 0.0, %v1409
    %v1411 = vpop.f32.mrf.mxu0
    %v1412 = vpop.f32.mrf.mxu0
    %v1413 = vpop.f32.mrf.mxu0
    %1414 = vdwg.mxu0
    %v1415 = vmul.f32 %v1088, 0.35355338
    %v1416 = vmul.f32 %v1134, 0.35355338
    %v1417 = vmul.f32 %v1180, 0.35355338
    %v1418 = vmul.f32 %v1226, 0.35355338
    %v1419 = vmul.f32 %v1272, 0.35355338
    %v1420 = vmul.f32 %v1318, 0.35355338
    %v1421 = vmul.f32 %v1364, 0.35355338
    %v1422 = vmul.f32 %v1410, 0.35355338
    %v1423 = vsel %vm1046, %v1415, -inf
    %1424 = vmax.xlane.f32.xlu0 %v1423
    %v1425 = vpop.xlane.xlu0 %1424
    %v1426 = vsel %vm1046, %v1416, -inf
    %1427 = vmax.xlane.f32.xlu0 %v1426
    %v1428 = vpop.xlane.xlu0 %1427
    %v1429 = vsel %vm1046, %v1417, -inf
    %1430 = vmax.xlane.f32.xlu0 %v1429
    %v1431 = vpop.xlane.xlu0 %1430
    %v1432 = vsel %vm1046, %v1418, -inf
    %1433 = vmax.xlane.f32.xlu0 %v1432
    %v1434 = vpop.xlane.xlu0 %1433
    %v1435 = vsel %vm1046, %v1419, -inf
    %1436 = vmax.xlane.f32.xlu0 %v1435
    %v1437 = vpop.xlane.xlu0 %1436
    %v1438 = vsel %vm1046, %v1420, -inf
    %1439 = vmax.xlane.f32.xlu0 %v1438
    %v1440 = vpop.xlane.xlu0 %1439
    %v1441 = vsel %vm1046, %v1421, -inf
    %1442 = vmax.xlane.f32.xlu0 %v1441
    %v1443 = vpop.xlane.xlu0 %1442
    %v1444 = vsel %vm1046, %v1422, -inf
    %1445 = vmax.xlane.f32.xlu0 %v1444
    %v1446 = vpop.xlane.xlu0 %1445
    %v1447 = vsub.f32 %v1415, %v1425
    %v1448 = vsub.f32 %v1416, %v1428
    %v1449 = vsub.f32 %v1417, %v1431
    %v1450 = vsub.f32 %v1418, %v1434
    %v1451 = vsub.f32 %v1419, %v1437
    %v1452 = vsub.f32 %v1420, %v1440
    %v1453 = vsub.f32 %v1421, %v1443
    %v1454 = vsub.f32 %v1422, %v1446
    %v1455 = vmul.f32 %v1447, 1.442695
    %v1456 = vpow.pop %v1455
    %v1457 = vmul.f32 %v1448, 1.442695
    %v1458 = vpow.pop %v1457
    %v1459 = vmul.f32 %v1449, 1.442695
    %v1460 = vpow.pop %v1459
    %v1461 = vmul.f32 %v1450, 1.442695
    %v1462 = vpow.pop %v1461
    %v1463 = vmul.f32 %v1451, 1.442695
    %v1464 = vpow.pop %v1463
    %v1465 = vmul.f32 %v1452, 1.442695
    %v1466 = vpow.pop %v1465
    %v1467 = vmul.f32 %v1453, 1.442695
    %v1468 = vpow.pop %v1467
    %v1469 = vmul.f32 %v1454, 1.442695
    %v1470 = vpow.pop %v1469
    %v1471 = vsel %vm1046, %v1456, 0.0
    %1472 = vadd.xlane.f32.xlu0 %v1471
    %v1473 = vpop.xlane.xlu0 %1472
    %v1474 = vsel %vm1046, %v1458, 0.0
    %1475 = vadd.xlane.f32.xlu0 %v1474
    %v1476 = vpop.xlane.xlu0 %1475
    %v1477 = vsel %vm1046, %v1460, 0.0
    %1478 = vadd.xlane.f32.xlu0 %v1477
    %v1479 = vpop.xlane.xlu0 %1478
    %v1480 = vsel %vm1046, %v1462, 0.0
    %1481 = vadd.xlane.f32.xlu0 %v1480
    %v1482 = vpop.xlane.xlu0 %1481
    %v1483 = vsel %vm1046, %v1464, 0.0
    %1484 = vadd.xlane.f32.xlu0 %v1483
    %v1485 = vpop.xlane.xlu0 %1484
    %v1486 = vsel %vm1046, %v1466, 0.0
    %1487 = vadd.xlane.f32.xlu0 %v1486
    %v1488 = vpop.xlane.xlu0 %1487
    %v1489 = vsel %vm1046, %v1468, 0.0
    %1490 = vadd.xlane.f32.xlu0 %v1489
    %v1491 = vpop.xlane.xlu0 %1490
    %v1492 = vsel %vm1046, %v1470, 0.0
    %1493 = vadd.xlane.f32.xlu0 %v1492
    %v1494 = vpop.xlane.xlu0 %1493
    %v1495 = vrcp.pop %v1473
    %v1496 = vrcp.pop %v1476
    %v1497 = vrcp.pop %v1479
    %v1498 = vrcp.pop %v1482
    %v1499 = vrcp.pop %v1485
    %v1500 = vrcp.pop %v1488
    %v1501 = vrcp.pop %v1491
    %v1502 = vrcp.pop %v1494
    %v1503 = vmul.f32 %v1456, %v1495
    %v1504 = vmul.f32 %v1458, %v1496
    %v1505 = vmul.f32 %v1460, %v1497
    %v1506 = vmul.f32 %v1462, %v1498
    %v1507 = vmul.f32 %v1464, %v1499
    %v1508 = vmul.f32 %v1466, %v1500
    %v1509 = vmul.f32 %v1468, %v1501
    %v1510 = vmul.f32 %v1470, %v1502
    %v1511 = vpack.c.bf16 %v1503, %v1503
    %v1512 = vpack.c.bf16 %v1504, %v1504
    %v1513 = vpack.c.bf16 %v1505, %v1505
    %v1514 = vpack.c.bf16 %v1506, %v1506
    %v1515 = vpack.c.bf16 %v1507, %v1507
    %v1516 = vpack.c.bf16 %v1508, %v1508
    %v1517 = vpack.c.bf16 %v1509, %v1509
    %v1518 = vpack.c.bf16 %v1510, %v1510
    %v1520 = vsel %vm1046, %v1511, 0
    %vm1522 = vcmask 1043456
    %v1524 = vsel %vm1522, %v1038, 0
    %1526 = vmatprep.subr.bf16.mxu0 0
    %1527 = vmatpush1.bf16.msra.mxu0 0
    %1528 = vmatprep.subr.bf16.mxu0 0
    %1529 = vmatpush1.bf16.msra.mxu0 0
    %1530 = vmatprep.subr.bf16.mxu0 0
    %1531 = vmatpush1.bf16.msra.mxu0 0
    %1532 = vmatprep.subr.bf16.mxu0 0
    %1533 = vmatpush1.bf16.msra.mxu0 0
    %1534 = vmatprep.subr.bf16.mxu0 0
    %1535 = vmatpush1.bf16.msra.mxu0 0
    %1536 = vmatprep.subr.bf16.mxu0 0
    %1537 = vmatpush1.bf16.msra.mxu0 0
    %1538 = vmatprep.subr.bf16.mxu0 0
    %1539 = vmatpush1.bf16.msra.mxu0 0
    %1540 = vmatprep.subr.bf16.mxu0 0
    %1541 = vmatpush1.bf16.msra.mxu0 %v1524
    %1542 = vmatprep.subr.bf16.mxu0 0
    %1543 = vmatpush2.bf16.msra.mxu0 0
    %1544 = vmatprep.subr.bf16.mxu0 0
    %1545 = vmatpush2.bf16.msra.mxu0 0
    %1546 = vmatprep.subr.bf16.mxu0 0
    %1547 = vmatpush2.bf16.msra.mxu0 0
    %1548 = vmatprep.subr.bf16.mxu0 0
    %1549 = vmatpush2.bf16.msra.mxu0 0
    %1550 = vmatprep.subr.bf16.mxu0 0
    %1551 = vmatpush2.bf16.msra.mxu0 0
    %1552 = vmatprep.subr.bf16.mxu0 0
    %1553 = vmatpush2.bf16.msra.mxu0 0
    %1554 = vmatprep.subr.bf16.mxu0 0
    %1555 = vmatpush2.bf16.msra.mxu0 0
    %1556 = vmatprep.subr.bf16.mxu0 0
    %1557 = vmatpush2.bf16.msra.mxu0 0
    %1558 = vmatprep.mubr.bf16.mxu0 0
    %1559 = vmatmul.mubr.bf16.gmra.mxu0 %v1520
    %v1560 = vpop.f32.mrf.mxu0
    %v1561 = vadd.f32 0.0, %v1560
    %v1562 = vpop.f32.mrf.mxu0
    %v1563 = vpop.f32.mrf.mxu0
    %v1564 = vpop.f32.mrf.mxu0
    %1565 = vdwg.mxu0
    %v1567 = vsel %vm1046, %v1512, 0
    %v1570 = vsel %vm1522, %v1039, 0
    %1572 = vmatprep.subr.bf16.mxu0 0
    %1573 = vmatpush1.bf16.msra.mxu0 0
    %1574 = vmatprep.subr.bf16.mxu0 0
    %1575 = vmatpush1.bf16.msra.mxu0 0
    %1576 = vmatprep.subr.bf16.mxu0 0
    %1577 = vmatpush1.bf16.msra.mxu0 0
    %1578 = vmatprep.subr.bf16.mxu0 0
    %1579 = vmatpush1.bf16.msra.mxu0 0
    %1580 = vmatprep.subr.bf16.mxu0 0
    %1581 = vmatpush1.bf16.msra.mxu0 0
    %1582 = vmatprep.subr.bf16.mxu0 0
    %1583 = vmatpush1.bf16.msra.mxu0 0
    %1584 = vmatprep.subr.bf16.mxu0 0
    %1585 = vmatpush1.bf16.msra.mxu0 0
    %1586 = vmatprep.subr.bf16.mxu0 0
    %1587 = vmatpush1.bf16.msra.mxu0 %v1570
    %1588 = vmatprep.subr.bf16.mxu0 0
    %1589 = vmatpush2.bf16.msra.mxu0 0
    %1590 = vmatprep.subr.bf16.mxu0 0
    %1591 = vmatpush2.bf16.msra.mxu0 0
    %1592 = vmatprep.subr.bf16.mxu0 0
    %1593 = vmatpush2.bf16.msra.mxu0 0
    %1594 = vmatprep.subr.bf16.mxu0 0
    %1595 = vmatpush2.bf16.msra.mxu0 0
    %1596 = vmatprep.subr.bf16.mxu0 0
    %1597 = vmatpush2.bf16.msra.mxu0 0
    %1598 = vmatprep.subr.bf16.mxu0 0
    %1599 = vmatpush2.bf16.msra.mxu0 0
    %1600 = vmatprep.subr.bf16.mxu0 0
    %1601 = vmatpush2.bf16.msra.mxu0 0
    %1602 = vmatprep.subr.bf16.mxu0 0
    %1603 = vmatpush2.bf16.msra.mxu0 0
    %1604 = vmatprep.mubr.bf16.mxu0 0
    %1605 = vmatmul.mubr.bf16.gmra.mxu0 %v1567
    %v1606 = vpop.f32.mrf.mxu0
    %v1607 = vadd.f32 0.0, %v1606
    %v1608 = vpop.f32.mrf.mxu0
    %v1609 = vpop.f32.mrf.mxu0
    %v1610 = vpop.f32.mrf.mxu0
    %1611 = vdwg.mxu0
    %v1613 = vsel %vm1046, %v1513, 0
    %v1616 = vsel %vm1522, %v1040, 0
    %1618 = vmatprep.subr.bf16.mxu0 0
    %1619 = vmatpush1.bf16.msra.mxu0 0
    %1620 = vmatprep.subr.bf16.mxu0 0
    %1621 = vmatpush1.bf16.msra.mxu0 0
    %1622 = vmatprep.subr.bf16.mxu0 0
    %1623 = vmatpush1.bf16.msra.mxu0 0
    %1624 = vmatprep.subr.bf16.mxu0 0
    %1625 = vmatpush1.bf16.msra.mxu0 0
    %1626 = vmatprep.subr.bf16.mxu0 0
    %1627 = vmatpush1.bf16.msra.mxu0 0
    %1628 = vmatprep.subr.bf16.mxu0 0
    %1629 = vmatpush1.bf16.msra.mxu0 0
    %1630 = vmatprep.subr.bf16.mxu0 0
    %1631 = vmatpush1.bf16.msra.mxu0 0
    %1632 = vmatprep.subr.bf16.mxu0 0
    %1633 = vmatpush1.bf16.msra.mxu0 %v1616
    %1634 = vmatprep.subr.bf16.mxu0 0
    %1635 = vmatpush2.bf16.msra.mxu0 0
    %1636 = vmatprep.subr.bf16.mxu0 0
    %1637 = vmatpush2.bf16.msra.mxu0 0
    %1638 = vmatprep.subr.bf16.mxu0 0
    %1639 = vmatpush2.bf16.msra.mxu0 0
    %1640 = vmatprep.subr.bf16.mxu0 0
    %1641 = vmatpush2.bf16.msra.mxu0 0
    %1642 = vmatprep.subr.bf16.mxu0 0
    %1643 = vmatpush2.bf16.msra.mxu0 0
    %1644 = vmatprep.subr.bf16.mxu0 0
    %1645 = vmatpush2.bf16.msra.mxu0 0
    %1646 = vmatprep.subr.bf16.mxu0 0
    %1647 = vmatpush2.bf16.msra.mxu0 0
    %1648 = vmatprep.subr.bf16.mxu0 0
    %1649 = vmatpush2.bf16.msra.mxu0 0
    %1650 = vmatprep.mubr.bf16.mxu0 0
    %1651 = vmatmul.mubr.bf16.gmra.mxu0 %v1613
    %v1652 = vpop.f32.mrf.mxu0
    %v1653 = vadd.f32 0.0, %v1652
    %v1654 = vpop.f32.mrf.mxu0
    %v1655 = vpop.f32.mrf.mxu0
    %v1656 = vpop.f32.mrf.mxu0
    %1657 = vdwg.mxu0
    %v1659 = vsel %vm1046, %v1514, 0
    %v1662 = vsel %vm1522, %v1041, 0
    %1664 = vmatprep.subr.bf16.mxu0 0
    %1665 = vmatpush1.bf16.msra.mxu0 0
    %1666 = vmatprep.subr.bf16.mxu0 0
    %1667 = vmatpush1.bf16.msra.mxu0 0
    %1668 = vmatprep.subr.bf16.mxu0 0
    %1669 = vmatpush1.bf16.msra.mxu0 0
    %1670 = vmatprep.subr.bf16.mxu0 0
    %1671 = vmatpush1.bf16.msra.mxu0 0
    %1672 = vmatprep.subr.bf16.mxu0 0
    %1673 = vmatpush1.bf16.msra.mxu0 0
    %1674 = vmatprep.subr.bf16.mxu0 0
    %1675 = vmatpush1.bf16.msra.mxu0 0
    %1676 = vmatprep.subr.bf16.mxu0 0
    %1677 = vmatpush1.bf16.msra.mxu0 0
    %1678 = vmatprep.subr.bf16.mxu0 0
    %1679 = vmatpush1.bf16.msra.mxu0 %v1662
    %1680 = vmatprep.subr.bf16.mxu0 0
    %1681 = vmatpush2.bf16.msra.mxu0 0
    %1682 = vmatprep.subr.bf16.mxu0 0
    %1683 = vmatpush2.bf16.msra.mxu0 0
    %1684 = vmatprep.subr.bf16.mxu0 0
    %1685 = vmatpush2.bf16.msra.mxu0 0
    %1686 = vmatprep.subr.bf16.mxu0 0
    %1687 = vmatpush2.bf16.msra.mxu0 0
    %1688 = vmatprep.subr.bf16.mxu0 0
    %1689 = vmatpush2.bf16.msra.mxu0 0
    %1690 = vmatprep.subr.bf16.mxu0 0
    %1691 = vmatpush2.bf16.msra.mxu0 0
    %1692 = vmatprep.subr.bf16.mxu0 0
    %1693 = vmatpush2.bf16.msra.mxu0 0
    %1694 = vmatprep.subr.bf16.mxu0 0
    %1695 = vmatpush2.bf16.msra.mxu0 0
    %1696 = vmatprep.mubr.bf16.mxu0 0
    %1697 = vmatmul.mubr.bf16.gmra.mxu0 %v1659
    %v1698 = vpop.f32.mrf.mxu0
    %v1699 = vadd.f32 0.0, %v1698
    %v1700 = vpop.f32.mrf.mxu0
    %v1701 = vpop.f32.mrf.mxu0
    %v1702 = vpop.f32.mrf.mxu0
    %1703 = vdwg.mxu0
    %v1705 = vsel %vm1046, %v1515, 0
    %v1708 = vsel %vm1522, %v1042, 0
    %1710 = vmatprep.subr.bf16.mxu0 0
    %1711 = vmatpush1.bf16.msra.mxu0 0
    %1712 = vmatprep.subr.bf16.mxu0 0
    %1713 = vmatpush1.bf16.msra.mxu0 0
    %1714 = vmatprep.subr.bf16.mxu0 0
    %1715 = vmatpush1.bf16.msra.mxu0 0
    %1716 = vmatprep.subr.bf16.mxu0 0
    %1717 = vmatpush1.bf16.msra.mxu0 0
    %1718 = vmatprep.subr.bf16.mxu0 0
    %1719 = vmatpush1.bf16.msra.mxu0 0
    %1720 = vmatprep.subr.bf16.mxu0 0
    %1721 = vmatpush1.bf16.msra.mxu0 0
    %1722 = vmatprep.subr.bf16.mxu0 0
    %1723 = vmatpush1.bf16.msra.mxu0 0
    %1724 = vmatprep.subr.bf16.mxu0 0
    %1725 = vmatpush1.bf16.msra.mxu0 %v1708
    %1726 = vmatprep.subr.bf16.mxu0 0
    %1727 = vmatpush2.bf16.msra.mxu0 0
    %1728 = vmatprep.subr.bf16.mxu0 0
    %1729 = vmatpush2.bf16.msra.mxu0 0
    %1730 = vmatprep.subr.bf16.mxu0 0
    %1731 = vmatpush2.bf16.msra.mxu0 0
    %1732 = vmatprep.subr.bf16.mxu0 0
    %1733 = vmatpush2.bf16.msra.mxu0 0
    %1734 = vmatprep.subr.bf16.mxu0 0
    %1735 = vmatpush2.bf16.msra.mxu0 0
    %1736 = vmatprep.subr.bf16.mxu0 0
    %1737 = vmatpush2.bf16.msra.mxu0 0
    %1738 = vmatprep.subr.bf16.mxu0 0
    %1739 = vmatpush2.bf16.msra.mxu0 0
    %1740 = vmatprep.subr.bf16.mxu0 0
    %1741 = vmatpush2.bf16.msra.mxu0 0
    %1742 = vmatprep.mubr.bf16.mxu0 0
    %1743 = vmatmul.mubr.bf16.gmra.mxu0 %v1705
    %v1744 = vpop.f32.mrf.mxu0
    %v1745 = vadd.f32 0.0, %v1744
    %v1746 = vpop.f32.mrf.mxu0
    %v1747 = vpop.f32.mrf.mxu0
    %v1748 = vpop.f32.mrf.mxu0
    %1749 = vdwg.mxu0
    %v1751 = vsel %vm1046, %v1516, 0
    %v1754 = vsel %vm1522, %v1043, 0
    %1756 = vmatprep.subr.bf16.mxu0 0
    %1757 = vmatpush1.bf16.msra.mxu0 0
    %1758 = vmatprep.subr.bf16.mxu0 0
    %1759 = vmatpush1.bf16.msra.mxu0 0
    %1760 = vmatprep.subr.bf16.mxu0 0
    %1761 = vmatpush1.bf16.msra.mxu0 0
    %1762 = vmatprep.subr.bf16.mxu0 0
    %1763 = vmatpush1.bf16.msra.mxu0 0
    %1764 = vmatprep.subr.bf16.mxu0 0
    %1765 = vmatpush1.bf16.msra.mxu0 0
    %1766 = vmatprep.subr.bf16.mxu0 0
    %1767 = vmatpush1.bf16.msra.mxu0 0
    %1768 = vmatprep.subr.bf16.mxu0 0
    %1769 = vmatpush1.bf16.msra.mxu0 0
    %1770 = vmatprep.subr.bf16.mxu0 0
    %1771 = vmatpush1.bf16.msra.mxu0 %v1754
    %1772 = vmatprep.subr.bf16.mxu0 0
    %1773 = vmatpush2.bf16.msra.mxu0 0
    %1774 = vmatprep.subr.bf16.mxu0 0
    %1775 = vmatpush2.bf16.msra.mxu0 0
    %1776 = vmatprep.subr.bf16.mxu0 0
    %1777 = vmatpush2.bf16.msra.mxu0 0
    %1778 = vmatprep.subr.bf16.mxu0 0
    %1779 = vmatpush2.bf16.msra.mxu0 0
    %1780 = vmatprep.subr.bf16.mxu0 0
    %1781 = vmatpush2.bf16.msra.mxu0 0
    %1782 = vmatprep.subr.bf16.mxu0 0
    %1783 = vmatpush2.bf16.msra.mxu0 0
    %1784 = vmatprep.subr.bf16.mxu0 0
    %1785 = vmatpush2.bf16.msra.mxu0 0
    %1786 = vmatprep.subr.bf16.mxu0 0
    %1787 = vmatpush2.bf16.msra.mxu0 0
    %1788 = vmatprep.mubr.bf16.mxu0 0
    %1789 = vmatmul.mubr.bf16.gmra.mxu0 %v1751
    %v1790 = vpop.f32.mrf.mxu0
    %v1791 = vadd.f32 0.0, %v1790
    %v1792 = vpop.f32.mrf.mxu0
    %v1793 = vpop.f32.mrf.mxu0
    %v1794 = vpop.f32.mrf.mxu0
    %1795 = vdwg.mxu0
    %v1797 = vsel %vm1046, %v1517, 0
    %v1800 = vsel %vm1522, %v1044, 0
    %1802 = vmatprep.subr.bf16.mxu0 0
    %1803 = vmatpush1.bf16.msra.mxu0 0
    %1804 = vmatprep.subr.bf16.mxu0 0
    %1805 = vmatpush1.bf16.msra.mxu0 0
    %1806 = vmatprep.subr.bf16.mxu0 0
    %1807 = vmatpush1.bf16.msra.mxu0 0
    %1808 = vmatprep.subr.bf16.mxu0 0
    %1809 = vmatpush1.bf16.msra.mxu0 0
    %1810 = vmatprep.subr.bf16.mxu0 0
    %1811 = vmatpush1.bf16.msra.mxu0 0
    %1812 = vmatprep.subr.bf16.mxu0 0
    %1813 = vmatpush1.bf16.msra.mxu0 0
    %1814 = vmatprep.subr.bf16.mxu0 0
    %1815 = vmatpush1.bf16.msra.mxu0 0
    %1816 = vmatprep.subr.bf16.mxu0 0
    %1817 = vmatpush1.bf16.msra.mxu0 %v1800
    %1818 = vmatprep.subr.bf16.mxu0 0
    %1819 = vmatpush2.bf16.msra.mxu0 0
    %1820 = vmatprep.subr.bf16.mxu0 0
    %1821 = vmatpush2.bf16.msra.mxu0 0
    %1822 = vmatprep.subr.bf16.mxu0 0
    %1823 = vmatpush2.bf16.msra.mxu0 0
    %1824 = vmatprep.subr.bf16.mxu0 0
    %1825 = vmatpush2.bf16.msra.mxu0 0
    %1826 = vmatprep.subr.bf16.mxu0 0
    %1827 = vmatpush2.bf16.msra.mxu0 0
    %1828 = vmatprep.subr.bf16.mxu0 0
    %1829 = vmatpush2.bf16.msra.mxu0 0
    %1830 = vmatprep.subr.bf16.mxu0 0
    %1831 = vmatpush2.bf16.msra.mxu0 0
    %1832 = vmatprep.subr.bf16.mxu0 0
    %1833 = vmatpush2.bf16.msra.mxu0 0
    %1834 = vmatprep.mubr.bf16.mxu0 0
    %1835 = vmatmul.mubr.bf16.gmra.mxu0 %v1797
    %v1836 = vpop.f32.mrf.mxu0
    %v1837 = vadd.f32 0.0, %v1836
    %v1838 = vpop.f32.mrf.mxu0
    %v1839 = vpop.f32.mrf.mxu0
    %v1840 = vpop.f32.mrf.mxu0
    %1841 = vdwg.mxu0
    %v1843 = vsel %vm1046, %v1518, 0
    %v1846 = vsel %vm1522, %v1045, 0
    %1848 = vmatprep.subr.bf16.mxu0 0
    %1849 = vmatpush1.bf16.msra.mxu0 0
    %1850 = vmatprep.subr.bf16.mxu0 0
    %1851 = vmatpush1.bf16.msra.mxu0 0
    %1852 = vmatprep.subr.bf16.mxu0 0
    %1853 = vmatpush1.bf16.msra.mxu0 0
    %1854 = vmatprep.subr.bf16.mxu0 0
    %1855 = vmatpush1.bf16.msra.mxu0 0
    %1856 = vmatprep.subr.bf16.mxu0 0
    %1857 = vmatpush1.bf16.msra.mxu0 0
    %1858 = vmatprep.subr.bf16.mxu0 0
    %1859 = vmatpush1.bf16.msra.mxu0 0
    %1860 = vmatprep.subr.bf16.mxu0 0
    %1861 = vmatpush1.bf16.msra.mxu0 0
    %1862 = vmatprep.subr.bf16.mxu0 0
    %1863 = vmatpush1.bf16.msra.mxu0 %v1846
    %1864 = vmatprep.subr.bf16.mxu0 0
    %1865 = vmatpush2.bf16.msra.mxu0 0
    %1866 = vmatprep.subr.bf16.mxu0 0
    %1867 = vmatpush2.bf16.msra.mxu0 0
    %1868 = vmatprep.subr.bf16.mxu0 0
    %1869 = vmatpush2.bf16.msra.mxu0 0
    %1870 = vmatprep.subr.bf16.mxu0 0
    %1871 = vmatpush2.bf16.msra.mxu0 0
    %1872 = vmatprep.subr.bf16.mxu0 0
    %1873 = vmatpush2.bf16.msra.mxu0 0
    %1874 = vmatprep.subr.bf16.mxu0 0
    %1875 = vmatpush2.bf16.msra.mxu0 0
    %1876 = vmatprep.subr.bf16.mxu0 0
    %1877 = vmatpush2.bf16.msra.mxu0 0
    %1878 = vmatprep.subr.bf16.mxu0 0
    %1879 = vmatpush2.bf16.msra.mxu0 0
    %1880 = vmatprep.mubr.bf16.mxu0 0
    %1881 = vmatmul.mubr.bf16.gmra.mxu0 %v1843
    %v1882 = vpop.f32.mrf.mxu0
    %v1883 = vadd.f32 0.0, %v1882
    %v1884 = vpop.f32.mrf.mxu0
    %v1885 = vpop.f32.mrf.mxu0
    %v1886 = vpop.f32.mrf.mxu0
    %1887 = vdwg.mxu0
    %v1888 = vcombine.low %v1561, %v1653
    %v1889 = vcombine.high %v1561, %v1653
    %v1891 = vunpack.c.l.s4 1983009808
    %v1892 = vunpack.c.0.s8 %v1891
    %v1893 = vlaneseq
    %v1894 = vshrl.u32 %v1893, 7
    %v1895 = vsub.s32 %v1892, %v1894
    %v1896 = vrot.slane %v1888, %v1895
    %v1898 = vunpack.c.l.s4 1983009808
    %v1899 = vunpack.c.0.s8 %v1898
    %v1900 = vlaneseq
    %v1901 = vshrl.u32 %v1900, 7
    %v1902 = vsub.s32 %v1899, %v1901
    %v1903 = vrot.slane %v1889, %v1902
    %v1904 = vcombine.low %v1607, %v1699
    %v1905 = vcombine.high %v1607, %v1699
    %v1907 = vunpack.c.l.s4 1983009808
    %v1908 = vunpack.c.0.s8 %v1907
    %v1909 = vlaneseq
    %v1910 = vshrl.u32 %v1909, 7
    %v1911 = vsub.s32 %v1908, %v1910
    %v1912 = vrot.slane %v1904, %v1911
    %v1914 = vunpack.c.l.s4 1983009808
    %v1915 = vunpack.c.0.s8 %v1914
    %v1916 = vlaneseq
    %v1917 = vshrl.u32 %v1916, 7
    %v1918 = vsub.s32 %v1915, %v1917
    %v1919 = vrot.slane %v1905, %v1918
    %v1920 = vcombine.low %v1896, %v1912
    %v1921 = vcombine.high %v1896, %v1912
    %v1923 = vunpack.c.l.s4 1934713408
    %v1924 = vunpack.c.0.s8 %v1923
    %v1925 = vlaneseq
    %v1926 = vshrl.u32 %v1925, 7
    %v1927 = vsub.s32 %v1924, %v1926
    %v1928 = vrot.slane %v1920, %v1927
    %v1930 = vunpack.c.l.s4 1934713408
    %v1931 = vunpack.c.0.s8 %v1930
    %v1932 = vlaneseq
    %v1933 = vshrl.u32 %v1932, 7
    %v1934 = vsub.s32 %v1931, %v1933
    %v1935 = vrot.slane %v1921, %v1934
    %v1936 = vcombine.low %v1903, %v1919
    %v1937 = vcombine.high %v1903, %v1919
    %v1939 = vunpack.c.l.s4 1934713408
    %v1940 = vunpack.c.0.s8 %v1939
    %v1941 = vlaneseq
    %v1942 = vshrl.u32 %v1941, 7
    %v1943 = vsub.s32 %v1940, %v1942
    %v1944 = vrot.slane %v1936, %v1943
    %v1946 = vunpack.c.l.s4 1934713408
    %v1947 = vunpack.c.0.s8 %v1946
    %v1948 = vlaneseq
    %v1949 = vshrl.u32 %v1948, 7
    %v1950 = vsub.s32 %v1947, %v1949
    %v1951 = vrot.slane %v1937, %v1950
    %v1952 = vcombine.high %v1928, 0.0
    %v1953 = vcombine.high %v1935, 0.0
    %v1954 = vcombine.high %v1944, 0.0
    %v1955 = vcombine.high %v1951, 0.0
    %v1956 = vcombine.low %v1745, %v1837
    %v1957 = vcombine.high %v1745, %v1837
    %v1959 = vunpack.c.l.s4 1983009808
    %v1960 = vunpack.c.0.s8 %v1959
    %v1961 = vlaneseq
    %v1962 = vshrl.u32 %v1961, 7
    %v1963 = vsub.s32 %v1960, %v1962
    %v1964 = vrot.slane %v1956, %v1963
    %v1966 = vunpack.c.l.s4 1983009808
    %v1967 = vunpack.c.0.s8 %v1966
    %v1968 = vlaneseq
    %v1969 = vshrl.u32 %v1968, 7
    %v1970 = vsub.s32 %v1967, %v1969
    %v1971 = vrot.slane %v1957, %v1970
    %v1972 = vcombine.low %v1791, %v1883
    %v1973 = vcombine.high %v1791, %v1883
    %v1975 = vunpack.c.l.s4 1983009808
    %v1976 = vunpack.c.0.s8 %v1975
    %v1977 = vlaneseq
    %v1978 = vshrl.u32 %v1977, 7
    %v1979 = vsub.s32 %v1976, %v1978
    %v1980 = vrot.slane %v1972, %v1979
    %v1982 = vunpack.c.l.s4 1983009808
    %v1983 = vunpack.c.0.s8 %v1982
    %v1984 = vlaneseq
    %v1985 = vshrl.u32 %v1984, 7
    %v1986 = vsub.s32 %v1983, %v1985
    %v1987 = vrot.slane %v1973, %v1986
    %v1988 = vcombine.low %v1964, %v1980
    %v1989 = vcombine.high %v1964, %v1980
    %v1991 = vunpack.c.l.s4 1934713408
    %v1992 = vunpack.c.0.s8 %v1991
    %v1993 = vlaneseq
    %v1994 = vshrl.u32 %v1993, 7
    %v1995 = vsub.s32 %v1992, %v1994
    %v1996 = vrot.slane %v1988, %v1995
    %v1998 = vunpack.c.l.s4 1934713408
    %v1999 = vunpack.c.0.s8 %v1998
    %v2000 = vlaneseq
    %v2001 = vshrl.u32 %v2000, 7
    %v2002 = vsub.s32 %v1999, %v2001
    %v2003 = vrot.slane %v1989, %v2002
    %v2004 = vcombine.low %v1971, %v1987
    %v2005 = vcombine.high %v1971, %v1987
    %v2007 = vunpack.c.l.s4 1934713408
    %v2008 = vunpack.c.0.s8 %v2007
    %v2009 = vlaneseq
    %v2010 = vshrl.u32 %v2009, 7
    %v2011 = vsub.s32 %v2008, %v2010
    %v2012 = vrot.slane %v2004, %v2011
    %v2014 = vunpack.c.l.s4 1934713408
    %v2015 = vunpack.c.0.s8 %v2014
    %v2016 = vlaneseq
    %v2017 = vshrl.u32 %v2016, 7
    %v2018 = vsub.s32 %v2015, %v2017
    %v2019 = vrot.slane %v2005, %v2018
    %v2020 = vcombine.high %v1996, 0.0
    %v2021 = vcombine.high %v2003, 0.0
    %v2022 = vcombine.high %v2012, 0.0
    %v2023 = vcombine.high %v2019, 0.0
    %v2024 = vcombine.low %v1928, %v1935
    %v2026 = vunpack.c.l.s4 1983009808
    %v2027 = vunpack.c.0.s8 %v2026
    %v2028 = vlaneseq
    %v2029 = vshrl.u32 %v2028, 7
    %v2030 = vsub.s32 %v2027, %v2029
    %v2031 = vrot.slane %v2024, %v2030
    %v2032 = vcombine.low %v1952, %v1953
    %v2034 = vunpack.c.l.s4 1983009808
    %v2035 = vunpack.c.0.s8 %v2034
    %v2036 = vlaneseq
    %v2037 = vshrl.u32 %v2036, 7
    %v2038 = vsub.s32 %v2035, %v2037
    %v2039 = vrot.slane %v2032, %v2038
    %v2040 = vcombine.low %v1944, %v1951
    %v2042 = vunpack.c.l.s4 1983009808
    %v2043 = vunpack.c.0.s8 %v2042
    %v2044 = vlaneseq
    %v2045 = vshrl.u32 %v2044, 7
    %v2046 = vsub.s32 %v2043, %v2045
    %v2047 = vrot.slane %v2040, %v2046
    %v2048 = vcombine.low %v1954, %v1955
    %v2050 = vunpack.c.l.s4 1983009808
    %v2051 = vunpack.c.0.s8 %v2050
    %v2052 = vlaneseq
    %v2053 = vshrl.u32 %v2052, 7
    %v2054 = vsub.s32 %v2051, %v2053
    %v2055 = vrot.slane %v2048, %v2054
    %v2056 = vcombine.low %v2031, %v2039
    %v2057 = vcombine.high %v2031, %v2039
    %v2059 = vunpack.c.l.s4 1934713408
    %v2060 = vunpack.c.0.s8 %v2059
    %v2061 = vlaneseq
    %v2062 = vshrl.u32 %v2061, 7
    %v2063 = vsub.s32 %v2060, %v2062
    %v2064 = vrot.slane %v2056, %v2063
    %v2066 = vunpack.c.l.s4 1934713408
    %v2067 = vunpack.c.0.s8 %v2066
    %v2068 = vlaneseq
    %v2069 = vshrl.u32 %v2068, 7
    %v2070 = vsub.s32 %v2067, %v2069
    %v2071 = vrot.slane %v2057, %v2070
    %v2072 = vcombine.low %v2047, %v2055
    %v2073 = vcombine.high %v2047, %v2055
    %v2075 = vunpack.c.l.s4 1934713408
    %v2076 = vunpack.c.0.s8 %v2075
    %v2077 = vlaneseq
    %v2078 = vshrl.u32 %v2077, 7
    %v2079 = vsub.s32 %v2076, %v2078
    %v2080 = vrot.slane %v2072, %v2079
    %v2082 = vunpack.c.l.s4 1934713408
    %v2083 = vunpack.c.0.s8 %v2082
    %v2084 = vlaneseq
    %v2085 = vshrl.u32 %v2084, 7
    %v2086 = vsub.s32 %v2083, %v2085
    %v2087 = vrot.slane %v2073, %v2086
    %v2088 = vcombine.low %v2064, %v2080
    %v2089 = vcombine.high %v2064, %v2080
    %v2090 = vcombine.low %v2071, %v2087
    %v2091 = vcombine.high %v2071, %v2087
    %v2092 = vcombine.low %v1996, %v2003
    %v2094 = vunpack.c.l.s4 1983009808
    %v2095 = vunpack.c.0.s8 %v2094
    %v2096 = vlaneseq
    %v2097 = vshrl.u32 %v2096, 7
    %v2098 = vsub.s32 %v2095, %v2097
    %v2099 = vrot.slane %v2092, %v2098
    %v2100 = vcombine.low %v2020, %v2021
    %v2102 = vunpack.c.l.s4 1983009808
    %v2103 = vunpack.c.0.s8 %v2102
    %v2104 = vlaneseq
    %v2105 = vshrl.u32 %v2104, 7
    %v2106 = vsub.s32 %v2103, %v2105
    %v2107 = vrot.slane %v2100, %v2106
    %v2108 = vcombine.low %v2012, %v2019
    %v2110 = vunpack.c.l.s4 1983009808
    %v2111 = vunpack.c.0.s8 %v2110
    %v2112 = vlaneseq
    %v2113 = vshrl.u32 %v2112, 7
    %v2114 = vsub.s32 %v2111, %v2113
    %v2115 = vrot.slane %v2108, %v2114
    %v2116 = vcombine.low %v2022, %v2023
    %v2118 = vunpack.c.l.s4 1983009808
    %v2119 = vunpack.c.0.s8 %v2118
    %v2120 = vlaneseq
    %v2121 = vshrl.u32 %v2120, 7
    %v2122 = vsub.s32 %v2119, %v2121
    %v2123 = vrot.slane %v2116, %v2122
    %v2124 = vcombine.low %v2099, %v2107
    %v2125 = vcombine.high %v2099, %v2107
    %v2127 = vunpack.c.l.s4 1934713408
    %v2128 = vunpack.c.0.s8 %v2127
    %v2129 = vlaneseq
    %v2130 = vshrl.u32 %v2129, 7
    %v2131 = vsub.s32 %v2128, %v2130
    %v2132 = vrot.slane %v2124, %v2131
    %v2134 = vunpack.c.l.s4 1934713408
    %v2135 = vunpack.c.0.s8 %v2134
    %v2136 = vlaneseq
    %v2137 = vshrl.u32 %v2136, 7
    %v2138 = vsub.s32 %v2135, %v2137
    %v2139 = vrot.slane %v2125, %v2138
    %v2140 = vcombine.low %v2115, %v2123
    %v2141 = vcombine.high %v2115, %v2123
    %v2143 = vunpack.c.l.s4 1934713408
    %v2144 = vunpack.c.0.s8 %v2143
    %v2145 = vlaneseq
    %v2146 = vshrl.u32 %v2145, 7
    %v2147 = vsub.s32 %v2144, %v2146
    %v2148 = vrot.slane %v2140, %v2147
    %v2150 = vunpack.c.l.s4 1934713408
    %v2151 = vunpack.c.0.s8 %v2150
    %v2152 = vlaneseq
    %v2153 = vshrl.u32 %v2152, 7
    %v2154 = vsub.s32 %v2151, %v2153
    %v2155 = vrot.slane %v2141, %v2154
    %v2156 = vcombine.low %v2132, %v2148
    %v2157 = vcombine.high %v2132, %v2148
    %v2158 = vcombine.low %v2139, %v2155
    %v2159 = vcombine.high %v2139, %v2155
    %2162 = vrot.lane.b32.xlu0 %v2089, 8
    %v2163 = vpop.permute.xlu0 %2162
    %2164 = vrot.lane.b32.xlu0 %v2157, 8
    %v2165 = vpop.permute.xlu0 %2164
    %2170 = vrot.lane.b32.xlu0 %v2090, 16
    %v2171 = vpop.permute.xlu0 %2170
    %2172 = vrot.lane.b32.xlu0 %v2158, 16
    %v2173 = vpop.permute.xlu0 %2172
    %2178 = vrot.lane.b32.xlu0 %v2091, 24
    %v2179 = vpop.permute.xlu0 %2178
    %2180 = vrot.lane.b32.xlu0 %v2159, 24
    %v2181 = vpop.permute.xlu0 %2180
    %v2184 = vsel %vm1046, %v2088, %v2163
    %v2185 = vsel %vm1046, %v2156, %v2165
    %vm2186 = vcmask 130048
    %v2187 = vsel %vm2186, %v2184, %v2171
    %v2188 = vsel %vm2186, %v2185, %v2173
    %vm2189 = vcmask 195584
    %v2190 = vsel %vm2189, %v2187, %v2179
    %v2191 = vsel %vm2189, %v2188, %v2181
    %v2192 = vpack.c.bf16 %v2191, %v2190
    %v2193 = vld [vmem:[#allocation7] sm:$0xf]
    %v2194 = vld [vmem:[#allocation7 + $0x4] sm:$0xf]
    %v2195 = vld [vmem:[#allocation7 + $0x8] sm:$0xf]
    %v2196 = vld [vmem:[#allocation7 + $0xc] sm:$0xf]
    %v2197 = vld [vmem:[%s4] sm:$0x1]
    %v2199 = vlaneseq
    %v2200 = vshrl.u32 %v2199, 7
    %v2201 = vsub.s32 0, %v2200
    %v2202 = vrot.slane %v2197, %v2201
    %v2208 = vunpack.c.l.b16 %v2193
    %v2209 = vunpack.c.l.b16 %v2194
    %v2210 = vunpack.c.l.b16 %v2195
    %v2211 = vunpack.c.l.b16 %v2196
    %v2212 = vpack.c.b16 %v2209, %v2208
    %v2213 = vpack.c.b16 %v2211, %v2210
    %v2217 = vsel %vm93, %v2192, 0
    %2219 = vmatprep.subr.bf16.mxu0 0
    %2220 = vmatpush1.bf16.msra.mxu0 0
    %2221 = vmatprep.subr.bf16.mxu0 0
    %2222 = vmatpush1.bf16.msra.mxu0 0
    %2223 = vmatprep.subr.bf16.mxu0 0
    %2224 = vmatpush1.bf16.msra.mxu0 0
    %2225 = vmatprep.subr.bf16.mxu0 0
    %2226 = vmatpush1.bf16.msra.mxu0 0
    %2227 = vmatprep.subr.bf16.mxu0 0
    %2228 = vmatpush1.bf16.msra.mxu0 0
    %2229 = vmatprep.subr.bf16.mxu0 0
    %2230 = vmatpush1.bf16.msra.mxu0 0
    %2231 = vmatprep.subr.bf16.mxu0 0
    %2232 = vmatpush1.bf16.msra.mxu0 %v2213
    %2233 = vmatprep.subr.bf16.mxu0 0
    %2234 = vmatpush1.bf16.msra.mxu0 %v2212
    %2235 = vmatprep.subr.bf16.mxu0 0
    %2236 = vmatpush2.bf16.msra.mxu0 0
    %2237 = vmatprep.subr.bf16.mxu0 0
    %2238 = vmatpush2.bf16.msra.mxu0 0
    %2239 = vmatprep.subr.bf16.mxu0 0
    %2240 = vmatpush2.bf16.msra.mxu0 0
    %2241 = vmatprep.subr.bf16.mxu0 0
    %2242 = vmatpush2.bf16.msra.mxu0 0
    %2243 = vmatprep.subr.bf16.mxu0 0
    %2244 = vmatpush2.bf16.msra.mxu0 0
    %2245 = vmatprep.subr.bf16.mxu0 0
    %2246 = vmatpush2.bf16.msra.mxu0 0
    %2247 = vmatprep.subr.bf16.mxu0 0
    %2248 = vmatpush2.bf16.msra.mxu0 0
    %2249 = vmatprep.subr.bf16.mxu0 0
    %2250 = vmatpush2.bf16.msra.mxu0 0
    %2251 = vmatprep.mubr.bf16.mxu0 0
    %2252 = vmatmul.mubr.bf16.gmra.mxu0 %v2217
    %v2253 = vpop.f32.mrf.mxu0
    %v2254 = vadd.f32 %v2202, %v2253
    %v2255 = vpop.f32.mrf.mxu0
    %v2256 = vpop.f32.mrf.mxu0
    %v2257 = vadd.f32 %v2202, %v2256
    %v2258 = vpop.f32.mrf.mxu0
    %2259 = vdwg.mxu0
    %2260 = vst.msk [vmem:[#allocation8] sm:$0xff] %vm93, %v2254
    %2261 = vst.msk [vmem:[#allocation8 + $0x8] sm:$0xff] %vm93, %v2257
    // Predicated region
    $region34: #{tpu_custom_call.1} parent=1 // pred_check
      _
    $region35: #{tpu_custom_call.1} parent=1 // pred_check_branch
      %2263 = sbr.rel (0) target = $region37
    $region36: #{tpu_custom_call.1} parent=1 // pred_region
      %s2265 = ssub.s32 256, 256
      %2266 = vsyncadd [#allocation4], %s2265
      %s2267 = sshll.u32 [#allocation8], 4
      %s2268 = int_to_ptr.vmem [resolvable:$true] %s2267
      %2273 = dma.vmem_to_hbm [thread:$0]  %s2268, 256, %s5, [#allocation4], 128, 128, 8
    $region37: #{tpu_custom_call.1} parent=1 // pred_fallthru
      _
    // Predicated region
    $region38: #{tpu_custom_call.1} parent=1 // pred_check
      _
    $region39: #{tpu_custom_call.1} parent=1 // pred_check_branch
      %2275 = sbr.rel (0) target = $region41
    $region40: #{tpu_custom_call.1} parent=1 // pred_region
      %2276 = dma.done [#allocation4], 256
    $region41: #{tpu_custom_call.1} parent=1 // pred_fallthru
      _
    %2277 = vsyncpa [#allocation3], 1
    %2278 = vsyncpa [#allocation6], 1
    %2279 = vsyncpa [#allocation4], 1

</llo_original>
